<compile_context>
chip_gen: v5e
topology: v5e:2x2
jax: 0.10.0
libtpu: 0.0.40
codegen_flags: <defaults>
</compile_context>

<pallas_src>
import functools

import numpy as np
import jax
import jax.numpy as jnp
from jax.experimental import pallas as pl
from jax.experimental.pallas import tpu as pltpu

BN_EPS = 1e-5
COS_EPS = 1e-8


# --------------------------- Kernel 1: fused features ------------------------
#
# Per-image layout: [H, W*C] with C minor in the lanes.  A conv output row oh
# only depends on input rows oh..oh+4, so conv+pool is computed as
#   pooled[i, owp*C + co] = max over 4 (row,col) pool phases of
#       relu( sum_kh  x[rows(phase) , :] @ M_{kh,colphase}  * scale + shift )
# where M are host-precomputed Toeplitz matrices [in_w*Cin, (out_w/2)*Cout].

def _fused_features_kernel(x_ref, m1e_ref, m1o_ref, s1_ref, t1_ref,
                           m2e_ref, m2o_ref, s2_ref, t2_ref,
                           wl_ref, bl_ref, o_ref, p1_ref, p2_ref):
    f32 = jnp.float32

    # ---- conv1 (5x5, 3->4) + BN + ReLU + 2x2 maxpool --------------------------
    ee = jnp.zeros((14, 56), f32)   # even conv rows, even conv cols
    eo = jnp.zeros((14, 56), f32)   # even rows, odd cols
    oe = jnp.zeros((14, 56), f32)   # odd rows, even cols
    oo = jnp.zeros((14, 56), f32)   # odd rows, odd cols
    for kh in range(5):
        xe = x_ref[pl.ds(kh, 14, stride=2), :]       # input rows kh, kh+2, ...
        xo = x_ref[pl.ds(kh + 1, 14, stride=2), :]   # input rows kh+1, kh+3, ...
        ee += jnp.dot(xe, m1e_ref[kh], preferred_element_type=f32)
        eo += jnp.dot(xe, m1o_ref[kh], preferred_element_type=f32)
        oe += jnp.dot(xo, m1e_ref[kh], preferred_element_type=f32)
        oo += jnp.dot(xo, m1o_ref[kh], preferred_element_type=f32)
    s, t = s1_ref[...], t1_ref[...]
    z = jnp.maximum(jnp.maximum(ee * s + t, eo * s + t),
                    jnp.maximum(oe * s + t, oo * s + t))
    p1_ref[...] = jnp.maximum(z, 0.0)                # [14, 14*4] = [H, W*C]

    # ---- conv2 (5x5, 4->8) + BN + ReLU + 2x2 maxpool --------------------------
    ee = jnp.zeros((5, 40), f32)
    eo = jnp.zeros((5, 40), f32)
    oe = jnp.zeros((5, 40), f32)
    oo = jnp.zeros((5, 40), f32)
    for kh in range(5):
        pe = p1_ref[pl.ds(kh, 5, stride=2), :]
        po = p1_ref[pl.ds(kh + 1, 5, stride=2), :]
        ee += jnp.dot(pe, m2e_ref[kh], preferred_element_type=f32)
        eo += jnp.dot(pe, m2o_ref[kh], preferred_element_type=f32)
        oe += jnp.dot(po, m2e_ref[kh], preferred_element_type=f32)
        oo += jnp.dot(po, m2o_ref[kh], preferred_element_type=f32)
    s, t = s2_ref[...], t2_ref[...]
    z = jnp.maximum(jnp.maximum(ee * s + t, eo * s + t),
                    jnp.maximum(oe * s + t, oo * s + t))
    p2_ref[...] = jnp.maximum(z, 0.0)                # [5, 5*8] = [H, W*C]

    # ---- Linear(200 -> 64) + ReLU (Dropout = identity in eval) ----------------
    acc = jnp.zeros((1, 64), f32)
    for h in range(5):
        acc += jnp.dot(p2_ref[pl.ds(h, 1), :], wl_ref[h], preferred_element_type=f32)
    o_ref[...] = jnp.maximum(acc + bl_ref[...], 0.0)


def fused_features(x_flat, params):
    """x_flat: [N, 32, 96] (= NHWC flattened over (W, C)) -> embeddings [N, 64]."""
    n = x_flat.shape[0]
    const3 = lambda b: (0, 0, 0)
    const2 = lambda b: (0, 0)
    out = pl.pallas_call(
        _fused_features_kernel,
        out_shape=jax.ShapeDtypeStruct((n, 1, 64), jnp.float32),
        grid=(n,),
        in_specs=[
            pl.BlockSpec((None, 32, 96), lambda b: (b, 0, 0)),   # image
            pl.BlockSpec((5, 96, 56), const3),                   # conv1 Toeplitz, even cols
            pl.BlockSpec((5, 96, 56), const3),                   # conv1 Toeplitz, odd cols
            pl.BlockSpec((1, 56), const2),                       # bn1 scale (tiled per col)
            pl.BlockSpec((1, 56), const2),                       # bn1 shift
            pl.BlockSpec((5, 56, 40), const3),                   # conv2 Toeplitz, even cols
            pl.BlockSpec((5, 56, 40), const3),                   # conv2 Toeplitz, odd cols
            pl.BlockSpec((1, 40), const2),                       # bn2 scale
            pl.BlockSpec((1, 40), const2),                       # bn2 shift
            pl.BlockSpec((5, 40, 64), const3),                   # linear weight, grouped by h
            pl.BlockSpec((1, 64), const2),                       # linear bias
        ],
        out_specs=pl.BlockSpec((None, 1, 64), lambda b: (b, 0, 0)),
        scratch_shapes=[pltpu.VMEM((14, 56), jnp.float32),       # pooled conv1
                        pltpu.VMEM((5, 40), jnp.float32)],       # pooled conv2
        compiler_params=pltpu.CompilerParams(dimension_semantics=("parallel",)),
    )(x_flat, params["m1e"], params["m1o"], params["s1"], params["t1"],
      params["m2e"], params["m2o"], params["s2"], params["t2"],
      params["wl"], params["bl"])
    return out.reshape(n, 64)


# --------------------------- Kernel 2: matching head -------------------------

def _matching_kernel(ns, nq, emb_ref, onehot_ref, cnt_ref, o_ref):
    sf = emb_ref[pl.ds(0, ns), :]        # support embeddings [NS, 64]
    qf = emb_ref[pl.ds(ns, nq), :]       # query embeddings   [NQ, 64]
    # class prototypes = per-class mean of support embeddings
    protos = jnp.dot(onehot_ref[...], sf, preferred_element_type=jnp.float32)
    protos = protos / jnp.maximum(cnt_ref[...], 1.0)
    # cosine similarity (each norm clamped separately, like F.cosine_similarity)
    qn = jnp.maximum(jnp.sqrt(jnp.sum(qf * qf, axis=-1, keepdims=True)), COS_EPS)
    pn = jnp.maximum(jnp.sqrt(jnp.sum(protos * protos, axis=-1, keepdims=True)), COS_EPS)
    qh = qf / qn
    ph = protos / pn
    o_ref[...] = jax.lax.dot_general(qh, ph, (((1,), (1,)), ((), ())),
                                     preferred_element_type=jnp.float32)


def matching_head(emb, onehot, counts, *, ns, nq):
    n_way = onehot.shape[0]
    kern = functools.partial(_matching_kernel, ns, nq)
    vmem = pl.BlockSpec(memory_space=pltpu.MemorySpace.VMEM)
    return pl.pallas_call(
        kern,
        out_shape=jax.ShapeDtypeStruct((nq, n_way), jnp.float32),
        in_specs=[vmem, vmem, vmem],
        out_specs=vmem,
    )(emb, onehot, counts)


# ------------------------------- Host-side prep ------------------------------

def _fold_bn(conv_bias, gamma, beta, mean, var):
    scale = gamma / np.sqrt(var + BN_EPS)
    shift = (conv_bias - mean) * scale + beta
    return scale.astype(np.float32), shift.astype(np.float32)


def _conv_pool_toeplitz(w_oihw, in_w):
    """Expand conv weight [Cout,Cin,K,K] into per-kh row-Toeplitz matrices.

    Returns (me, mo) of shape [K, in_w*Cin, (out_w/2)*Cout] producing the even /
    odd output columns respectively, in (ow_pooled, cout) lane order.
    """
    cout, cin, k, _ = w_oihw.shape
    out_w = in_w - k + 1
    half = out_w // 2
    me = np.zeros((k, in_w * cin, half * cout), np.float32)
    mo = np.zeros((k, in_w * cin, half * cout), np.float32)
    for kh in range(k):
        for kw in range(k):
            for ci in range(cin):
                for co in range(cout):
                    v = w_oihw[co, ci, kh, kw]
                    for owp in range(half):
                        me[kh, (2 * owp + kw) * cin + ci, owp * cout + co] = v
                        mo[kh, (2 * owp + 1 + kw) * cin + ci, owp * cout + co] = v
    return me, mo


def init_params(key):
    ks = jax.random.split(key, 6)
    # PyTorch-layout parameters (random stand-ins for a trained checkpoint).
    w1 = np.asarray(jax.random.normal(ks[0], (4, 3, 5, 5), jnp.float32)) * 0.1
    b1 = np.asarray(jax.random.normal(ks[1], (4,), jnp.float32)) * 0.1
    w2 = np.asarray(jax.random.normal(ks[2], (8, 4, 5, 5), jnp.float32)) * 0.1
    b2 = np.asarray(jax.random.normal(ks[3], (8,), jnp.float32)) * 0.1
    wl = np.asarray(jax.random.normal(ks[4], (64, 200), jnp.float32)) * 0.05  # Linear [out, in]
    bl = np.asarray(jax.random.normal(ks[5], (64,), jnp.float32)) * 0.05

    # TODO(synk): BN folded with PyTorch-default running stats (mean=0, var=1,
    # gamma=1, beta=0); a trained checkpoint must fold its real stats here.
    s1, t1 = _fold_bn(b1, np.ones(4, np.float32), np.zeros(4, np.float32),
                      np.zeros(4, np.float32), np.ones(4, np.float32))
    s2, t2 = _fold_bn(b2, np.ones(8, np.float32), np.zeros(8, np.float32),
                      np.zeros(8, np.float32), np.ones(8, np.float32))

    m1e, m1o = _conv_pool_toeplitz(w1, in_w=32)   # [5, 96, 56]
    m2e, m2o = _conv_pool_toeplitz(w2, in_w=14)   # [5, 56, 40]

    # Linear weight regrouped to [h][w*C + c, out] matching the kernel's
    # (h, w, c) feature layout; PyTorch flattens NCHW as (c, h, w).
    wl3 = np.transpose(wl.reshape(64, 8, 5, 5), (2, 3, 1, 0)).reshape(5, 40, 64)

    return dict(
        m1e=jnp.asarray(m1e), m1o=jnp.asarray(m1o),
        s1=jnp.asarray(np.tile(s1, 14)[None, :]), t1=jnp.asarray(np.tile(t1, 14)[None, :]),
        m2e=jnp.asarray(m2e), m2o=jnp.asarray(m2o),
        s2=jnp.asarray(np.tile(s2, 5)[None, :]), t2=jnp.asarray(np.tile(t2, 5)[None, :]),
        wl=jnp.asarray(wl3), bl=jnp.asarray(bl[None, :]),
    )


def matching_lenet_forward(params, support_x, support_y, query_x, *, n_way):
    ns, c, h, w = support_x.shape
    nq = query_x.shape[0]
    assert (c, h, w) == (3, 32, 32), "LeNet geometry requires 3x32x32 input"
    # Support + query through the fused feature/embedding kernel as ONE batch.
    x = jnp.concatenate([support_x, query_x], axis=0)
    x = jnp.transpose(x, (0, 2, 3, 1)).reshape(ns + nq, h, w * c)  # [N, H, W*C]
    emb = fused_features(x.astype(jnp.float32), params)            # [NS+NQ, 64]
    # TODO(synk): `attention = softmax(cosine(query, support))` in the PyTorch
    # forward is dead code (never used for the returned value); not computed.
    onehot = (support_y[None, :] == jnp.arange(n_way)[:, None]).astype(jnp.float32)
    counts = onehot.sum(axis=1, keepdims=True)
    return matching_head(emb, onehot, counts, ns=ns, nq=nq)         # [n_query, n_way]


if __name__ == "__main__":
    key = jax.random.PRNGKey(0)
    kp, ksx, kqx = jax.random.split(key, 3)

    n_way, k_shot, n_query = 3, 2, 4
    params = init_params(kp)

    support_x = jax.random.normal(ksx, (n_way * k_shot, 3, 32, 32), jnp.float32)
    support_y = jnp.repeat(jnp.arange(n_way, dtype=jnp.int32), k_shot)
    query_x = jax.random.normal(kqx, (n_query, 3, 32, 32), jnp.float32)

    fwd = jax.jit(functools.partial(matching_lenet_forward, n_way=n_way))
    out = fwd(params, support_x, support_y, query_x)
    jax.block_until_ready(out)
    assert out.shape == (n_query, n_way)
    assert bool(jnp.all(jnp.isfinite(out)))
    print("KERNEL_OK")
</pallas_src>

<mosaic_0001>
module attributes {stable_mosaic.version = 11 : i64} {
  func.func @_fused_features_kernel(%arg0: i32, %arg1: memref<1x32x96xf32, #tpu.memory_space<vmem>>, %arg2: memref<5x96x56xf32, #tpu.memory_space<vmem>>, %arg3: memref<5x96x56xf32, #tpu.memory_space<vmem>>, %arg4: memref<1x56xf32, #tpu.memory_space<vmem>>, %arg5: memref<1x56xf32, #tpu.memory_space<vmem>>, %arg6: memref<5x56x40xf32, #tpu.memory_space<vmem>>, %arg7: memref<5x56x40xf32, #tpu.memory_space<vmem>>, %arg8: memref<1x40xf32, #tpu.memory_space<vmem>>, %arg9: memref<1x40xf32, #tpu.memory_space<vmem>>, %arg10: memref<5x40x64xf32, #tpu.memory_space<vmem>>, %arg11: memref<1x64xf32, #tpu.memory_space<vmem>>, %arg12: memref<1x1x64xf32, #tpu.memory_space<vmem>>, %arg13: memref<14x56xf32, #tpu.memory_space<vmem>>, %arg14: memref<5x40xf32, #tpu.memory_space<vmem>>) attributes {dimension_semantics = [#tpu.dimension_semantics<parallel>], iteration_bounds = array<i64: 10>, scalar_prefetch = 0 : i64, scratch_operands = 2 : i64, tpu.core_type = #tpu.core_type<tc>, window_params = [{transform_indices = @transform_0, window_bounds = array<i64: 1, 32, 96>}, {pipeline_mode = #tpu.pipeline_mode<synchronous>, transform_indices = @transform_1, window_bounds = array<i64: 5, 96, 56>}, {pipeline_mode = #tpu.pipeline_mode<synchronous>, transform_indices = @transform_2, window_bounds = array<i64: 5, 96, 56>}, {pipeline_mode = #tpu.pipeline_mode<synchronous>, transform_indices = @transform_3, window_bounds = array<i64: 1, 56>}, {pipeline_mode = #tpu.pipeline_mode<synchronous>, transform_indices = @transform_4, window_bounds = array<i64: 1, 56>}, {pipeline_mode = #tpu.pipeline_mode<synchronous>, transform_indices = @transform_5, window_bounds = array<i64: 5, 56, 40>}, {pipeline_mode = #tpu.pipeline_mode<synchronous>, transform_indices = @transform_6, window_bounds = array<i64: 5, 56, 40>}, {pipeline_mode = #tpu.pipeline_mode<synchronous>, transform_indices = @transform_7, window_bounds = array<i64: 1, 40>}, {pipeline_mode = #tpu.pipeline_mode<synchronous>, transform_indices = @transform_8, window_bounds = array<i64: 1, 40>}, {pipeline_mode = #tpu.pipeline_mode<synchronous>, transform_indices = @transform_9, window_bounds = array<i64: 5, 40, 64>}, {pipeline_mode = #tpu.pipeline_mode<synchronous>, transform_indices = @transform_10, window_bounds = array<i64: 1, 64>}, {transform_indices = @transform_11, window_bounds = array<i64: 1, 1, 64>}]} {
    %cst = arith.constant 0.000000e+00 : f32
    %0 = vector.broadcast %cst : f32 to vector<14x56xf32>
    %cst_0 = arith.constant 0.000000e+00 : f32
    %1 = vector.broadcast %cst_0 : f32 to vector<14x56xf32>
    %cst_1 = arith.constant 0.000000e+00 : f32
    %2 = vector.broadcast %cst_1 : f32 to vector<14x56xf32>
    %cst_2 = arith.constant 0.000000e+00 : f32
    %3 = vector.broadcast %cst_2 : f32 to vector<14x56xf32>
    %c0 = arith.constant 0 : index
    %c0_3 = arith.constant 0 : index
    %c0_4 = arith.constant 0 : index
    %4 = tpu.strided_load %arg1[%c0, %c0_3, %c0_4] {strides = array<i32: 1, 2, 1>} : memref<1x32x96xf32, #tpu.memory_space<vmem>>, vector<1x14x96xf32>
    %5 = vector.shape_cast %4 : vector<1x14x96xf32> to vector<14x96xf32>
    %c0_5 = arith.constant 0 : index
    %c1 = arith.constant 1 : index
    %c0_6 = arith.constant 0 : index
    %6 = tpu.strided_load %arg1[%c0_5, %c1, %c0_6] {strides = array<i32: 1, 2, 1>} : memref<1x32x96xf32, #tpu.memory_space<vmem>>, vector<1x14x96xf32>
    %7 = vector.shape_cast %6 : vector<1x14x96xf32> to vector<14x96xf32>
    %c0_7 = arith.constant 0 : index
    %c0_8 = arith.constant 0 : index
    %c0_9 = arith.constant 0 : index
    %8 = vector.load %arg2[%c0_7, %c0_8, %c0_9] : memref<5x96x56xf32, #tpu.memory_space<vmem>>, vector<1x96x56xf32>
    %9 = vector.shape_cast %8 : vector<1x96x56xf32> to vector<96x56xf32>
    %cst_10 = arith.constant dense<0.000000e+00> : vector<14x56xf32>
    %10 = tpu.matmul %5, %9, %cst_10 {dimension_numbers = #tpu.dot_dimension_numbers<[1], [0], [0], [1], [0, 0, 1, 1], [], []>} : vector<14x96xf32>, vector<96x56xf32>, vector<14x56xf32> -> vector<14x56xf32>
    %11 = arith.addf %0, %10 : vector<14x56xf32>
    %c0_11 = arith.constant 0 : index
    %c0_12 = arith.constant 0 : index
    %c0_13 = arith.constant 0 : index
    %12 = vector.load %arg3[%c0_11, %c0_12, %c0_13] : memref<5x96x56xf32, #tpu.memory_space<vmem>>, vector<1x96x56xf32>
    %13 = vector.shape_cast %12 : vector<1x96x56xf32> to vector<96x56xf32>
    %cst_14 = arith.constant dense<0.000000e+00> : vector<14x56xf32>
    %14 = tpu.matmul %5, %13, %cst_14 {dimension_numbers = #tpu.dot_dimension_numbers<[1], [0], [0], [1], [0, 0, 1, 1], [], []>} : vector<14x96xf32>, vector<96x56xf32>, vector<14x56xf32> -> vector<14x56xf32>
    %15 = arith.addf %1, %14 : vector<14x56xf32>
    %c0_15 = arith.constant 0 : index
    %c0_16 = arith.constant 0 : index
    %c0_17 = arith.constant 0 : index
    %16 = vector.load %arg2[%c0_15, %c0_16, %c0_17] : memref<5x96x56xf32, #tpu.memory_space<vmem>>, vector<1x96x56xf32>
    %17 = vector.shape_cast %16 : vector<1x96x56xf32> to vector<96x56xf32>
    %cst_18 = arith.constant dense<0.000000e+00> : vector<14x56xf32>
    %18 = tpu.matmul %7, %17, %cst_18 {dimension_numbers = #tpu.dot_dimension_numbers<[1], [0], [0], [1], [0, 0, 1, 1], [], []>} : vector<14x96xf32>, vector<96x56xf32>, vector<14x56xf32> -> vector<14x56xf32>
    %19 = arith.addf %2, %18 : vector<14x56xf32>
    %c0_19 = arith.constant 0 : index
    %c0_20 = arith.constant 0 : index
    %c0_21 = arith.constant 0 : index
    %20 = vector.load %arg3[%c0_19, %c0_20, %c0_21] : memref<5x96x56xf32, #tpu.memory_space<vmem>>, vector<1x96x56xf32>
    %21 = vector.shape_cast %20 : vector<1x96x56xf32> to vector<96x56xf32>
    %cst_22 = arith.constant dense<0.000000e+00> : vector<14x56xf32>
    %22 = tpu.matmul %7, %21, %cst_22 {dimension_numbers = #tpu.dot_dimension_numbers<[1], [0], [0], [1], [0, 0, 1, 1], [], []>} : vector<14x96xf32>, vector<96x56xf32>, vector<14x56xf32> -> vector<14x56xf32>
    %23 = arith.addf %3, %22 : vector<14x56xf32>
    %c0_23 = arith.constant 0 : index
    %c1_24 = arith.constant 1 : index
    %c0_25 = arith.constant 0 : index
    %24 = tpu.strided_load %arg1[%c0_23, %c1_24, %c0_25] {strides = array<i32: 1, 2, 1>} : memref<1x32x96xf32, #tpu.memory_space<vmem>>, vector<1x14x96xf32>
    %25 = vector.shape_cast %24 : vector<1x14x96xf32> to vector<14x96xf32>
    %c0_26 = arith.constant 0 : index
    %c2 = arith.constant 2 : index
    %c0_27 = arith.constant 0 : index
    %26 = tpu.strided_load %arg1[%c0_26, %c2, %c0_27] {strides = array<i32: 1, 2, 1>} : memref<1x32x96xf32, #tpu.memory_space<vmem>>, vector<1x14x96xf32>
    %27 = vector.shape_cast %26 : vector<1x14x96xf32> to vector<14x96xf32>
    %c1_28 = arith.constant 1 : index
    %c0_29 = arith.constant 0 : index
    %c0_30 = arith.constant 0 : index
    %28 = vector.load %arg2[%c1_28, %c0_29, %c0_30] : memref<5x96x56xf32, #tpu.memory_space<vmem>>, vector<1x96x56xf32>
    %29 = vector.shape_cast %28 : vector<1x96x56xf32> to vector<96x56xf32>
    %cst_31 = arith.constant dense<0.000000e+00> : vector<14x56xf32>
    %30 = tpu.matmul %25, %29, %cst_31 {dimension_numbers = #tpu.dot_dimension_numbers<[1], [0], [0], [1], [0, 0, 1, 1], [], []>} : vector<14x96xf32>, vector<96x56xf32>, vector<14x56xf32> -> vector<14x56xf32>
    %31 = arith.addf %11, %30 : vector<14x56xf32>
    %c1_32 = arith.constant 1 : index
    %c0_33 = arith.constant 0 : index
    %c0_34 = arith.constant 0 : index
    %32 = vector.load %arg3[%c1_32, %c0_33, %c0_34] : memref<5x96x56xf32, #tpu.memory_space<vmem>>, vector<1x96x56xf32>
    %33 = vector.shape_cast %32 : vector<1x96x56xf32> to vector<96x56xf32>
    %cst_35 = arith.constant dense<0.000000e+00> : vector<14x56xf32>
    %34 = tpu.matmul %25, %33, %cst_35 {dimension_numbers = #tpu.dot_dimension_numbers<[1], [0], [0], [1], [0, 0, 1, 1], [], []>} : vector<14x96xf32>, vector<96x56xf32>, vector<14x56xf32> -> vector<14x56xf32>
    %35 = arith.addf %15, %34 : vector<14x56xf32>
    %c1_36 = arith.constant 1 : index
    %c0_37 = arith.constant 0 : index
    %c0_38 = arith.constant 0 : index
    %36 = vector.load %arg2[%c1_36, %c0_37, %c0_38] : memref<5x96x56xf32, #tpu.memory_space<vmem>>, vector<1x96x56xf32>
    %37 = vector.shape_cast %36 : vector<1x96x56xf32> to vector<96x56xf32>
    %cst_39 = arith.constant dense<0.000000e+00> : vector<14x56xf32>
    %38 = tpu.matmul %27, %37, %cst_39 {dimension_numbers = #tpu.dot_dimension_numbers<[1], [0], [0], [1], [0, 0, 1, 1], [], []>} : vector<14x96xf32>, vector<96x56xf32>, vector<14x56xf32> -> vector<14x56xf32>
    %39 = arith.addf %19, %38 : vector<14x56xf32>
    %c1_40 = arith.constant 1 : index
    %c0_41 = arith.constant 0 : index
    %c0_42 = arith.constant 0 : index
    %40 = vector.load %arg3[%c1_40, %c0_41, %c0_42] : memref<5x96x56xf32, #tpu.memory_space<vmem>>, vector<1x96x56xf32>
    %41 = vector.shape_cast %40 : vector<1x96x56xf32> to vector<96x56xf32>
    %cst_43 = arith.constant dense<0.000000e+00> : vector<14x56xf32>
    %42 = tpu.matmul %27, %41, %cst_43 {dimension_numbers = #tpu.dot_dimension_numbers<[1], [0], [0], [1], [0, 0, 1, 1], [], []>} : vector<14x96xf32>, vector<96x56xf32>, vector<14x56xf32> -> vector<14x56xf32>
    %43 = arith.addf %23, %42 : vector<14x56xf32>
    %c0_44 = arith.constant 0 : index
    %c2_45 = arith.constant 2 : index
    %c0_46 = arith.constant 0 : index
    %44 = tpu.strided_load %arg1[%c0_44, %c2_45, %c0_46] {strides = array<i32: 1, 2, 1>} : memref<1x32x96xf32, #tpu.memory_space<vmem>>, vector<1x14x96xf32>
    %45 = vector.shape_cast %44 : vector<1x14x96xf32> to vector<14x96xf32>
    %c0_47 = arith.constant 0 : index
    %c3 = arith.constant 3 : index
    %c0_48 = arith.constant 0 : index
    %46 = tpu.strided_load %arg1[%c0_47, %c3, %c0_48] {strides = array<i32: 1, 2, 1>} : memref<1x32x96xf32, #tpu.memory_space<vmem>>, vector<1x14x96xf32>
    %47 = vector.shape_cast %46 : vector<1x14x96xf32> to vector<14x96xf32>
    %c2_49 = arith.constant 2 : index
    %c0_50 = arith.constant 0 : index
    %c0_51 = arith.constant 0 : index
    %48 = vector.load %arg2[%c2_49, %c0_50, %c0_51] : memref<5x96x56xf32, #tpu.memory_space<vmem>>, vector<1x96x56xf32>
    %49 = vector.shape_cast %48 : vector<1x96x56xf32> to vector<96x56xf32>
    %cst_52 = arith.constant dense<0.000000e+00> : vector<14x56xf32>
    %50 = tpu.matmul %45, %49, %cst_52 {dimension_numbers = #tpu.dot_dimension_numbers<[1], [0], [0], [1], [0, 0, 1, 1], [], []>} : vector<14x96xf32>, vector<96x56xf32>, vector<14x56xf32> -> vector<14x56xf32>
    %51 = arith.addf %31, %50 : vector<14x56xf32>
    %c2_53 = arith.constant 2 : index
    %c0_54 = arith.constant 0 : index
    %c0_55 = arith.constant 0 : index
    %52 = vector.load %arg3[%c2_53, %c0_54, %c0_55] : memref<5x96x56xf32, #tpu.memory_space<vmem>>, vector<1x96x56xf32>
    %53 = vector.shape_cast %52 : vector<1x96x56xf32> to vector<96x56xf32>
    %cst_56 = arith.constant dense<0.000000e+00> : vector<14x56xf32>
    %54 = tpu.matmul %45, %53, %cst_56 {dimension_numbers = #tpu.dot_dimension_numbers<[1], [0], [0], [1], [0, 0, 1, 1], [], []>} : vector<14x96xf32>, vector<96x56xf32>, vector<14x56xf32> -> vector<14x56xf32>
    %55 = arith.addf %35, %54 : vector<14x56xf32>
    %c2_57 = arith.constant 2 : index
    %c0_58 = arith.constant 0 : index
    %c0_59 = arith.constant 0 : index
    %56 = vector.load %arg2[%c2_57, %c0_58, %c0_59] : memref<5x96x56xf32, #tpu.memory_space<vmem>>, vector<1x96x56xf32>
    %57 = vector.shape_cast %56 : vector<1x96x56xf32> to vector<96x56xf32>
    %cst_60 = arith.constant dense<0.000000e+00> : vector<14x56xf32>
    %58 = tpu.matmul %47, %57, %cst_60 {dimension_numbers = #tpu.dot_dimension_numbers<[1], [0], [0], [1], [0, 0, 1, 1], [], []>} : vector<14x96xf32>, vector<96x56xf32>, vector<14x56xf32> -> vector<14x56xf32>
    %59 = arith.addf %39, %58 : vector<14x56xf32>
    %c2_61 = arith.constant 2 : index
    %c0_62 = arith.constant 0 : index
    %c0_63 = arith.constant 0 : index
    %60 = vector.load %arg3[%c2_61, %c0_62, %c0_63] : memref<5x96x56xf32, #tpu.memory_space<vmem>>, vector<1x96x56xf32>
    %61 = vector.shape_cast %60 : vector<1x96x56xf32> to vector<96x56xf32>
    %cst_64 = arith.constant dense<0.000000e+00> : vector<14x56xf32>
    %62 = tpu.matmul %47, %61, %cst_64 {dimension_numbers = #tpu.dot_dimension_numbers<[1], [0], [0], [1], [0, 0, 1, 1], [], []>} : vector<14x96xf32>, vector<96x56xf32>, vector<14x56xf32> -> vector<14x56xf32>
    %63 = arith.addf %43, %62 : vector<14x56xf32>
    %c0_65 = arith.constant 0 : index
    %c3_66 = arith.constant 3 : index
    %c0_67 = arith.constant 0 : index
    %64 = tpu.strided_load %arg1[%c0_65, %c3_66, %c0_67] {strides = array<i32: 1, 2, 1>} : memref<1x32x96xf32, #tpu.memory_space<vmem>>, vector<1x14x96xf32>
    %65 = vector.shape_cast %64 : vector<1x14x96xf32> to vector<14x96xf32>
    %c0_68 = arith.constant 0 : index
    %c4 = arith.constant 4 : index
    %c0_69 = arith.constant 0 : index
    %66 = tpu.strided_load %arg1[%c0_68, %c4, %c0_69] {strides = array<i32: 1, 2, 1>} : memref<1x32x96xf32, #tpu.memory_space<vmem>>, vector<1x14x96xf32>
    %67 = vector.shape_cast %66 : vector<1x14x96xf32> to vector<14x96xf32>
    %c3_70 = arith.constant 3 : index
    %c0_71 = arith.constant 0 : index
    %c0_72 = arith.constant 0 : index
    %68 = vector.load %arg2[%c3_70, %c0_71, %c0_72] : memref<5x96x56xf32, #tpu.memory_space<vmem>>, vector<1x96x56xf32>
    %69 = vector.shape_cast %68 : vector<1x96x56xf32> to vector<96x56xf32>
    %cst_73 = arith.constant dense<0.000000e+00> : vector<14x56xf32>
    %70 = tpu.matmul %65, %69, %cst_73 {dimension_numbers = #tpu.dot_dimension_numbers<[1], [0], [0], [1], [0, 0, 1, 1], [], []>} : vector<14x96xf32>, vector<96x56xf32>, vector<14x56xf32> -> vector<14x56xf32>
    %71 = arith.addf %51, %70 : vector<14x56xf32>
    %c3_74 = arith.constant 3 : index
    %c0_75 = arith.constant 0 : index
    %c0_76 = arith.constant 0 : index
    %72 = vector.load %arg3[%c3_74, %c0_75, %c0_76] : memref<5x96x56xf32, #tpu.memory_space<vmem>>, vector<1x96x56xf32>
    %73 = vector.shape_cast %72 : vector<1x96x56xf32> to vector<96x56xf32>
    %cst_77 = arith.constant dense<0.000000e+00> : vector<14x56xf32>
    %74 = tpu.matmul %65, %73, %cst_77 {dimension_numbers = #tpu.dot_dimension_numbers<[1], [0], [0], [1], [0, 0, 1, 1], [], []>} : vector<14x96xf32>, vector<96x56xf32>, vector<14x56xf32> -> vector<14x56xf32>
    %75 = arith.addf %55, %74 : vector<14x56xf32>
    %c3_78 = arith.constant 3 : index
    %c0_79 = arith.constant 0 : index
    %c0_80 = arith.constant 0 : index
    %76 = vector.load %arg2[%c3_78, %c0_79, %c0_80] : memref<5x96x56xf32, #tpu.memory_space<vmem>>, vector<1x96x56xf32>
    %77 = vector.shape_cast %76 : vector<1x96x56xf32> to vector<96x56xf32>
    %cst_81 = arith.constant dense<0.000000e+00> : vector<14x56xf32>
    %78 = tpu.matmul %67, %77, %cst_81 {dimension_numbers = #tpu.dot_dimension_numbers<[1], [0], [0], [1], [0, 0, 1, 1], [], []>} : vector<14x96xf32>, vector<96x56xf32>, vector<14x56xf32> -> vector<14x56xf32>
    %79 = arith.addf %59, %78 : vector<14x56xf32>
    %c3_82 = arith.constant 3 : index
    %c0_83 = arith.constant 0 : index
    %c0_84 = arith.constant 0 : index
    %80 = vector.load %arg3[%c3_82, %c0_83, %c0_84] : memref<5x96x56xf32, #tpu.memory_space<vmem>>, vector<1x96x56xf32>
    %81 = vector.shape_cast %80 : vector<1x96x56xf32> to vector<96x56xf32>
    %cst_85 = arith.constant dense<0.000000e+00> : vector<14x56xf32>
    %82 = tpu.matmul %67, %81, %cst_85 {dimension_numbers = #tpu.dot_dimension_numbers<[1], [0], [0], [1], [0, 0, 1, 1], [], []>} : vector<14x96xf32>, vector<96x56xf32>, vector<14x56xf32> -> vector<14x56xf32>
    %83 = arith.addf %63, %82 : vector<14x56xf32>
    %c0_86 = arith.constant 0 : index
    %c4_87 = arith.constant 4 : index
    %c0_88 = arith.constant 0 : index
    %84 = tpu.strided_load %arg1[%c0_86, %c4_87, %c0_88] {strides = array<i32: 1, 2, 1>} : memref<1x32x96xf32, #tpu.memory_space<vmem>>, vector<1x14x96xf32>
    %85 = vector.shape_cast %84 : vector<1x14x96xf32> to vector<14x96xf32>
    %c0_89 = arith.constant 0 : index
    %c5 = arith.constant 5 : index
    %c0_90 = arith.constant 0 : index
    %86 = tpu.strided_load %arg1[%c0_89, %c5, %c0_90] {strides = array<i32: 1, 2, 1>} : memref<1x32x96xf32, #tpu.memory_space<vmem>>, vector<1x14x96xf32>
    %87 = vector.shape_cast %86 : vector<1x14x96xf32> to vector<14x96xf32>
    %c4_91 = arith.constant 4 : index
    %c0_92 = arith.constant 0 : index
    %c0_93 = arith.constant 0 : index
    %88 = vector.load %arg2[%c4_91, %c0_92, %c0_93] : memref<5x96x56xf32, #tpu.memory_space<vmem>>, vector<1x96x56xf32>
    %89 = vector.shape_cast %88 : vector<1x96x56xf32> to vector<96x56xf32>
    %cst_94 = arith.constant dense<0.000000e+00> : vector<14x56xf32>
    %90 = tpu.matmul %85, %89, %cst_94 {dimension_numbers = #tpu.dot_dimension_numbers<[1], [0], [0], [1], [0, 0, 1, 1], [], []>} : vector<14x96xf32>, vector<96x56xf32>, vector<14x56xf32> -> vector<14x56xf32>
    %91 = arith.addf %71, %90 : vector<14x56xf32>
    %c4_95 = arith.constant 4 : index
    %c0_96 = arith.constant 0 : index
    %c0_97 = arith.constant 0 : index
    %92 = vector.load %arg3[%c4_95, %c0_96, %c0_97] : memref<5x96x56xf32, #tpu.memory_space<vmem>>, vector<1x96x56xf32>
    %93 = vector.shape_cast %92 : vector<1x96x56xf32> to vector<96x56xf32>
    %cst_98 = arith.constant dense<0.000000e+00> : vector<14x56xf32>
    %94 = tpu.matmul %85, %93, %cst_98 {dimension_numbers = #tpu.dot_dimension_numbers<[1], [0], [0], [1], [0, 0, 1, 1], [], []>} : vector<14x96xf32>, vector<96x56xf32>, vector<14x56xf32> -> vector<14x56xf32>
    %95 = arith.addf %75, %94 : vector<14x56xf32>
    %c4_99 = arith.constant 4 : index
    %c0_100 = arith.constant 0 : index
    %c0_101 = arith.constant 0 : index
    %96 = vector.load %arg2[%c4_99, %c0_100, %c0_101] : memref<5x96x56xf32, #tpu.memory_space<vmem>>, vector<1x96x56xf32>
    %97 = vector.shape_cast %96 : vector<1x96x56xf32> to vector<96x56xf32>
    %cst_102 = arith.constant dense<0.000000e+00> : vector<14x56xf32>
    %98 = tpu.matmul %87, %97, %cst_102 {dimension_numbers = #tpu.dot_dimension_numbers<[1], [0], [0], [1], [0, 0, 1, 1], [], []>} : vector<14x96xf32>, vector<96x56xf32>, vector<14x56xf32> -> vector<14x56xf32>
    %99 = arith.addf %79, %98 : vector<14x56xf32>
    %c4_103 = arith.constant 4 : index
    %c0_104 = arith.constant 0 : index
    %c0_105 = arith.constant 0 : index
    %100 = vector.load %arg3[%c4_103, %c0_104, %c0_105] : memref<5x96x56xf32, #tpu.memory_space<vmem>>, vector<1x96x56xf32>
    %101 = vector.shape_cast %100 : vector<1x96x56xf32> to vector<96x56xf32>
    %cst_106 = arith.constant dense<0.000000e+00> : vector<14x56xf32>
    %102 = tpu.matmul %87, %101, %cst_106 {dimension_numbers = #tpu.dot_dimension_numbers<[1], [0], [0], [1], [0, 0, 1, 1], [], []>} : vector<14x96xf32>, vector<96x56xf32>, vector<14x56xf32> -> vector<14x56xf32>
    %103 = arith.addf %83, %102 : vector<14x56xf32>
    %c0_107 = arith.constant 0 : index
    %c0_108 = arith.constant 0 : index
    %104 = vector.load %arg4[%c0_107, %c0_108] : memref<1x56xf32, #tpu.memory_space<vmem>>, vector<1x56xf32>
    %c0_109 = arith.constant 0 : index
    %c0_110 = arith.constant 0 : index
    %105 = vector.load %arg5[%c0_109, %c0_110] : memref<1x56xf32, #tpu.memory_space<vmem>>, vector<1x56xf32>
    %106 = vector.broadcast %104 : vector<1x56xf32> to vector<14x56xf32>
    %107 = arith.mulf %91, %106 : vector<14x56xf32>
    %108 = vector.broadcast %105 : vector<1x56xf32> to vector<14x56xf32>
    %109 = arith.addf %107, %108 : vector<14x56xf32>
    %110 = vector.broadcast %104 : vector<1x56xf32> to vector<14x56xf32>
    %111 = arith.mulf %95, %110 : vector<14x56xf32>
    %112 = vector.broadcast %105 : vector<1x56xf32> to vector<14x56xf32>
    %113 = arith.addf %111, %112 : vector<14x56xf32>
    %114 = arith.maximumf %109, %113 : vector<14x56xf32>
    %115 = vector.broadcast %104 : vector<1x56xf32> to vector<14x56xf32>
    %116 = arith.mulf %99, %115 : vector<14x56xf32>
    %117 = vector.broadcast %105 : vector<1x56xf32> to vector<14x56xf32>
    %118 = arith.addf %116, %117 : vector<14x56xf32>
    %119 = vector.broadcast %104 : vector<1x56xf32> to vector<14x56xf32>
    %120 = arith.mulf %103, %119 : vector<14x56xf32>
    %121 = vector.broadcast %105 : vector<1x56xf32> to vector<14x56xf32>
    %122 = arith.addf %120, %121 : vector<14x56xf32>
    %123 = arith.maximumf %118, %122 : vector<14x56xf32>
    %124 = arith.maximumf %114, %123 : vector<14x56xf32>
    %cst_111 = arith.constant 0.000000e+00 : f32
    %125 = vector.broadcast %cst_111 : f32 to vector<14x56xf32>
    %126 = arith.maximumf %124, %125 : vector<14x56xf32>
    %c0_112 = arith.constant 0 : index
    %c0_113 = arith.constant 0 : index
    %127 = vector.load %arg13[%c0_112, %c0_113] : memref<14x56xf32, #tpu.memory_space<vmem>>, vector<14x56xf32>
    tpu.vector_store %arg13[%c0_112, %c0_113], %126 {strides = array<i32>} : memref<14x56xf32, #tpu.memory_space<vmem>>, vector<14x56xf32>,
    %cst_114 = arith.constant 0.000000e+00 : f32
    %128 = vector.broadcast %cst_114 : f32 to vector<5x40xf32>
    %cst_115 = arith.constant 0.000000e+00 : f32
    %129 = vector.broadcast %cst_115 : f32 to vector<5x40xf32>
    %cst_116 = arith.constant 0.000000e+00 : f32
    %130 = vector.broadcast %cst_116 : f32 to vector<5x40xf32>
    %cst_117 = arith.constant 0.000000e+00 : f32
    %131 = vector.broadcast %cst_117 : f32 to vector<5x40xf32>
    %c0_118 = arith.constant 0 : index
    %c0_119 = arith.constant 0 : index
    %132 = tpu.strided_load %arg13[%c0_118, %c0_119] {strides = array<i32: 2, 1>} : memref<14x56xf32, #tpu.memory_space<vmem>>, vector<5x56xf32>
    %c1_120 = arith.constant 1 : index
    %c0_121 = arith.constant 0 : index
    %133 = tpu.strided_load %arg13[%c1_120, %c0_121] {strides = array<i32: 2, 1>} : memref<14x56xf32, #tpu.memory_space<vmem>>, vector<5x56xf32>
    %c0_122 = arith.constant 0 : index
    %c0_123 = arith.constant 0 : index
    %c0_124 = arith.constant 0 : index
    %134 = vector.load %arg6[%c0_122, %c0_123, %c0_124] : memref<5x56x40xf32, #tpu.memory_space<vmem>>, vector<1x56x40xf32>
    %135 = vector.shape_cast %134 : vector<1x56x40xf32> to vector<56x40xf32>
    %cst_125 = arith.constant dense<0.000000e+00> : vector<5x40xf32>
    %136 = tpu.matmul %132, %135, %cst_125 {dimension_numbers = #tpu.dot_dimension_numbers<[1], [0], [0], [1], [0, 0, 1, 1], [], []>} : vector<5x56xf32>, vector<56x40xf32>, vector<5x40xf32> -> vector<5x40xf32>
    %137 = arith.addf %128, %136 : vector<5x40xf32>
    %c0_126 = arith.constant 0 : index
    %c0_127 = arith.constant 0 : index
    %c0_128 = arith.constant 0 : index
    %138 = vector.load %arg7[%c0_126, %c0_127, %c0_128] : memref<5x56x40xf32, #tpu.memory_space<vmem>>, vector<1x56x40xf32>
    %139 = vector.shape_cast %138 : vector<1x56x40xf32> to vector<56x40xf32>
    %cst_129 = arith.constant dense<0.000000e+00> : vector<5x40xf32>
    %140 = tpu.matmul %132, %139, %cst_129 {dimension_numbers = #tpu.dot_dimension_numbers<[1], [0], [0], [1], [0, 0, 1, 1], [], []>} : vector<5x56xf32>, vector<56x40xf32>, vector<5x40xf32> -> vector<5x40xf32>
    %141 = arith.addf %129, %140 : vector<5x40xf32>
    %c0_130 = arith.constant 0 : index
    %c0_131 = arith.constant 0 : index
    %c0_132 = arith.constant 0 : index
    %142 = vector.load %arg6[%c0_130, %c0_131, %c0_132] : memref<5x56x40xf32, #tpu.memory_space<vmem>>, vector<1x56x40xf32>
    %143 = vector.shape_cast %142 : vector<1x56x40xf32> to vector<56x40xf32>
    %cst_133 = arith.constant dense<0.000000e+00> : vector<5x40xf32>
    %144 = tpu.matmul %133, %143, %cst_133 {dimension_numbers = #tpu.dot_dimension_numbers<[1], [0], [0], [1], [0, 0, 1, 1], [], []>} : vector<5x56xf32>, vector<56x40xf32>, vector<5x40xf32> -> vector<5x40xf32>
    %145 = arith.addf %130, %144 : vector<5x40xf32>
    %c0_134 = arith.constant 0 : index
    %c0_135 = arith.constant 0 : index
    %c0_136 = arith.constant 0 : index
    %146 = vector.load %arg7[%c0_134, %c0_135, %c0_136] : memref<5x56x40xf32, #tpu.memory_space<vmem>>, vector<1x56x40xf32>
    %147 = vector.shape_cast %146 : vector<1x56x40xf32> to vector<56x40xf32>
    %cst_137 = arith.constant dense<0.000000e+00> : vector<5x40xf32>
    %148 = tpu.matmul %133, %147, %cst_137 {dimension_numbers = #tpu.dot_dimension_numbers<[1], [0], [0], [1], [0, 0, 1, 1], [], []>} : vector<5x56xf32>, vector<56x40xf32>, vector<5x40xf32> -> vector<5x40xf32>
    %149 = arith.addf %131, %148 : vector<5x40xf32>
    %c1_138 = arith.constant 1 : index
    %c0_139 = arith.constant 0 : index
    %150 = tpu.strided_load %arg13[%c1_138, %c0_139] {strides = array<i32: 2, 1>} : memref<14x56xf32, #tpu.memory_space<vmem>>, vector<5x56xf32>
    %c2_140 = arith.constant 2 : index
    %c0_141 = arith.constant 0 : index
    %151 = tpu.strided_load %arg13[%c2_140, %c0_141] {strides = array<i32: 2, 1>} : memref<14x56xf32, #tpu.memory_space<vmem>>, vector<5x56xf32>
    %c1_142 = arith.constant 1 : index
    %c0_143 = arith.constant 0 : index
    %c0_144 = arith.constant 0 : index
    %152 = vector.load %arg6[%c1_142, %c0_143, %c0_144] : memref<5x56x40xf32, #tpu.memory_space<vmem>>, vector<1x56x40xf32>
    %153 = vector.shape_cast %152 : vector<1x56x40xf32> to vector<56x40xf32>
    %cst_145 = arith.constant dense<0.000000e+00> : vector<5x40xf32>
    %154 = tpu.matmul %150, %153, %cst_145 {dimension_numbers = #tpu.dot_dimension_numbers<[1], [0], [0], [1], [0, 0, 1, 1], [], []>} : vector<5x56xf32>, vector<56x40xf32>, vector<5x40xf32> -> vector<5x40xf32>
    %155 = arith.addf %137, %154 : vector<5x40xf32>
    %c1_146 = arith.constant 1 : index
    %c0_147 = arith.constant 0 : index
    %c0_148 = arith.constant 0 : index
    %156 = vector.load %arg7[%c1_146, %c0_147, %c0_148] : memref<5x56x40xf32, #tpu.memory_space<vmem>>, vector<1x56x40xf32>
    %157 = vector.shape_cast %156 : vector<1x56x40xf32> to vector<56x40xf32>
    %cst_149 = arith.constant dense<0.000000e+00> : vector<5x40xf32>
    %158 = tpu.matmul %150, %157, %cst_149 {dimension_numbers = #tpu.dot_dimension_numbers<[1], [0], [0], [1], [0, 0, 1, 1], [], []>} : vector<5x56xf32>, vector<56x40xf32>, vector<5x40xf32> -> vector<5x40xf32>
    %159 = arith.addf %141, %158 : vector<5x40xf32>
    %c1_150 = arith.constant 1 : index
    %c0_151 = arith.constant 0 : index
    %c0_152 = arith.constant 0 : index
    %160 = vector.load %arg6[%c1_150, %c0_151, %c0_152] : memref<5x56x40xf32, #tpu.memory_space<vmem>>, vector<1x56x40xf32>
    %161 = vector.shape_cast %160 : vector<1x56x40xf32> to vector<56x40xf32>
    %cst_153 = arith.constant dense<0.000000e+00> : vector<5x40xf32>
    %162 = tpu.matmul %151, %161, %cst_153 {dimension_numbers = #tpu.dot_dimension_numbers<[1], [0], [0], [1], [0, 0, 1, 1], [], []>} : vector<5x56xf32>, vector<56x40xf32>, vector<5x40xf32> -> vector<5x40xf32>
    %163 = arith.addf %145, %162 : vector<5x40xf32>
    %c1_154 = arith.constant 1 : index
    %c0_155 = arith.constant 0 : index
    %c0_156 = arith.constant 0 : index
    %164 = vector.load %arg7[%c1_154, %c0_155, %c0_156] : memref<5x56x40xf32, #tpu.memory_space<vmem>>, vector<1x56x40xf32>
    %165 = vector.shape_cast %164 : vector<1x56x40xf32> to vector<56x40xf32>
    %cst_157 = arith.constant dense<0.000000e+00> : vector<5x40xf32>
    %166 = tpu.matmul %151, %165, %cst_157 {dimension_numbers = #tpu.dot_dimension_numbers<[1], [0], [0], [1], [0, 0, 1, 1], [], []>} : vector<5x56xf32>, vector<56x40xf32>, vector<5x40xf32> -> vector<5x40xf32>
    %167 = arith.addf %149, %166 : vector<5x40xf32>
    %c2_158 = arith.constant 2 : index
    %c0_159 = arith.constant 0 : index
    %168 = tpu.strided_load %arg13[%c2_158, %c0_159] {strides = array<i32: 2, 1>} : memref<14x56xf32, #tpu.memory_space<vmem>>, vector<5x56xf32>
    %c3_160 = arith.constant 3 : index
    %c0_161 = arith.constant 0 : index
    %169 = tpu.strided_load %arg13[%c3_160, %c0_161] {strides = array<i32: 2, 1>} : memref<14x56xf32, #tpu.memory_space<vmem>>, vector<5x56xf32>
    %c2_162 = arith.constant 2 : index
    %c0_163 = arith.constant 0 : index
    %c0_164 = arith.constant 0 : index
    %170 = vector.load %arg6[%c2_162, %c0_163, %c0_164] : memref<5x56x40xf32, #tpu.memory_space<vmem>>, vector<1x56x40xf32>
    %171 = vector.shape_cast %170 : vector<1x56x40xf32> to vector<56x40xf32>
    %cst_165 = arith.constant dense<0.000000e+00> : vector<5x40xf32>
    %172 = tpu.matmul %168, %171, %cst_165 {dimension_numbers = #tpu.dot_dimension_numbers<[1], [0], [0], [1], [0, 0, 1, 1], [], []>} : vector<5x56xf32>, vector<56x40xf32>, vector<5x40xf32> -> vector<5x40xf32>
    %173 = arith.addf %155, %172 : vector<5x40xf32>
    %c2_166 = arith.constant 2 : index
    %c0_167 = arith.constant 0 : index
    %c0_168 = arith.constant 0 : index
    %174 = vector.load %arg7[%c2_166, %c0_167, %c0_168] : memref<5x56x40xf32, #tpu.memory_space<vmem>>, vector<1x56x40xf32>
    %175 = vector.shape_cast %174 : vector<1x56x40xf32> to vector<56x40xf32>
    %cst_169 = arith.constant dense<0.000000e+00> : vector<5x40xf32>
    %176 = tpu.matmul %168, %175, %cst_169 {dimension_numbers = #tpu.dot_dimension_numbers<[1], [0], [0], [1], [0, 0, 1, 1], [], []>} : vector<5x56xf32>, vector<56x40xf32>, vector<5x40xf32> -> vector<5x40xf32>
    %177 = arith.addf %159, %176 : vector<5x40xf32>
    %c2_170 = arith.constant 2 : index
    %c0_171 = arith.constant 0 : index
    %c0_172 = arith.constant 0 : index
    %178 = vector.load %arg6[%c2_170, %c0_171, %c0_172] : memref<5x56x40xf32, #tpu.memory_space<vmem>>, vector<1x56x40xf32>
    %179 = vector.shape_cast %178 : vector<1x56x40xf32> to vector<56x40xf32>
    %cst_173 = arith.constant dense<0.000000e+00> : vector<5x40xf32>
    %180 = tpu.matmul %169, %179, %cst_173 {dimension_numbers = #tpu.dot_dimension_numbers<[1], [0], [0], [1], [0, 0, 1, 1], [], []>} : vector<5x56xf32>, vector<56x40xf32>, vector<5x40xf32> -> vector<5x40xf32>
    %181 = arith.addf %163, %180 : vector<5x40xf32>
    %c2_174 = arith.constant 2 : index
    %c0_175 = arith.constant 0 : index
    %c0_176 = arith.constant 0 : index
    %182 = vector.load %arg7[%c2_174, %c0_175, %c0_176] : memref<5x56x40xf32, #tpu.memory_space<vmem>>, vector<1x56x40xf32>
    %183 = vector.shape_cast %182 : vector<1x56x40xf32> to vector<56x40xf32>
    %cst_177 = arith.constant dense<0.000000e+00> : vector<5x40xf32>
    %184 = tpu.matmul %169, %183, %cst_177 {dimension_numbers = #tpu.dot_dimension_numbers<[1], [0], [0], [1], [0, 0, 1, 1], [], []>} : vector<5x56xf32>, vector<56x40xf32>, vector<5x40xf32> -> vector<5x40xf32>
    %185 = arith.addf %167, %184 : vector<5x40xf32>
    %c3_178 = arith.constant 3 : index
    %c0_179 = arith.constant 0 : index
    %186 = tpu.strided_load %arg13[%c3_178, %c0_179] {strides = array<i32: 2, 1>} : memref<14x56xf32, #tpu.memory_space<vmem>>, vector<5x56xf32>
    %c4_180 = arith.constant 4 : index
    %c0_181 = arith.constant 0 : index
    %187 = tpu.strided_load %arg13[%c4_180, %c0_181] {strides = array<i32: 2, 1>} : memref<14x56xf32, #tpu.memory_space<vmem>>, vector<5x56xf32>
    %c3_182 = arith.constant 3 : index
    %c0_183 = arith.constant 0 : index
    %c0_184 = arith.constant 0 : index
    %188 = vector.load %arg6[%c3_182, %c0_183, %c0_184] : memref<5x56x40xf32, #tpu.memory_space<vmem>>, vector<1x56x40xf32>
    %189 = vector.shape_cast %188 : vector<1x56x40xf32> to vector<56x40xf32>
    %cst_185 = arith.constant dense<0.000000e+00> : vector<5x40xf32>
    %190 = tpu.matmul %186, %189, %cst_185 {dimension_numbers = #tpu.dot_dimension_numbers<[1], [0], [0], [1], [0, 0, 1, 1], [], []>} : vector<5x56xf32>, vector<56x40xf32>, vector<5x40xf32> -> vector<5x40xf32>
    %191 = arith.addf %173, %190 : vector<5x40xf32>
    %c3_186 = arith.constant 3 : index
    %c0_187 = arith.constant 0 : index
    %c0_188 = arith.constant 0 : index
    %192 = vector.load %arg7[%c3_186, %c0_187, %c0_188] : memref<5x56x40xf32, #tpu.memory_space<vmem>>, vector<1x56x40xf32>
    %193 = vector.shape_cast %192 : vector<1x56x40xf32> to vector<56x40xf32>
    %cst_189 = arith.constant dense<0.000000e+00> : vector<5x40xf32>
    %194 = tpu.matmul %186, %193, %cst_189 {dimension_numbers = #tpu.dot_dimension_numbers<[1], [0], [0], [1], [0, 0, 1, 1], [], []>} : vector<5x56xf32>, vector<56x40xf32>, vector<5x40xf32> -> vector<5x40xf32>
    %195 = arith.addf %177, %194 : vector<5x40xf32>
    %c3_190 = arith.constant 3 : index
    %c0_191 = arith.constant 0 : index
    %c0_192 = arith.constant 0 : index
    %196 = vector.load %arg6[%c3_190, %c0_191, %c0_192] : memref<5x56x40xf32, #tpu.memory_space<vmem>>, vector<1x56x40xf32>
    %197 = vector.shape_cast %196 : vector<1x56x40xf32> to vector<56x40xf32>
    %cst_193 = arith.constant dense<0.000000e+00> : vector<5x40xf32>
    %198 = tpu.matmul %187, %197, %cst_193 {dimension_numbers = #tpu.dot_dimension_numbers<[1], [0], [0], [1], [0, 0, 1, 1], [], []>} : vector<5x56xf32>, vector<56x40xf32>, vector<5x40xf32> -> vector<5x40xf32>
    %199 = arith.addf %181, %198 : vector<5x40xf32>
    %c3_194 = arith.constant 3 : index
    %c0_195 = arith.constant 0 : index
    %c0_196 = arith.constant 0 : index
    %200 = vector.load %arg7[%c3_194, %c0_195, %c0_196] : memref<5x56x40xf32, #tpu.memory_space<vmem>>, vector<1x56x40xf32>
    %201 = vector.shape_cast %200 : vector<1x56x40xf32> to vector<56x40xf32>
    %cst_197 = arith.constant dense<0.000000e+00> : vector<5x40xf32>
    %202 = tpu.matmul %187, %201, %cst_197 {dimension_numbers = #tpu.dot_dimension_numbers<[1], [0], [0], [1], [0, 0, 1, 1], [], []>} : vector<5x56xf32>, vector<56x40xf32>, vector<5x40xf32> -> vector<5x40xf32>
    %203 = arith.addf %185, %202 : vector<5x40xf32>
    %c4_198 = arith.constant 4 : index
    %c0_199 = arith.constant 0 : index
    %204 = tpu.strided_load %arg13[%c4_198, %c0_199] {strides = array<i32: 2, 1>} : memref<14x56xf32, #tpu.memory_space<vmem>>, vector<5x56xf32>
    %c5_200 = arith.constant 5 : index
    %c0_201 = arith.constant 0 : index
    %205 = tpu.strided_load %arg13[%c5_200, %c0_201] {strides = array<i32: 2, 1>} : memref<14x56xf32, #tpu.memory_space<vmem>>, vector<5x56xf32>
    %c4_202 = arith.constant 4 : index
    %c0_203 = arith.constant 0 : index
    %c0_204 = arith.constant 0 : index
    %206 = vector.load %arg6[%c4_202, %c0_203, %c0_204] : memref<5x56x40xf32, #tpu.memory_space<vmem>>, vector<1x56x40xf32>
    %207 = vector.shape_cast %206 : vector<1x56x40xf32> to vector<56x40xf32>
    %cst_205 = arith.constant dense<0.000000e+00> : vector<5x40xf32>
    %208 = tpu.matmul %204, %207, %cst_205 {dimension_numbers = #tpu.dot_dimension_numbers<[1], [0], [0], [1], [0, 0, 1, 1], [], []>} : vector<5x56xf32>, vector<56x40xf32>, vector<5x40xf32> -> vector<5x40xf32>
    %209 = arith.addf %191, %208 : vector<5x40xf32>
    %c4_206 = arith.constant 4 : index
    %c0_207 = arith.constant 0 : index
    %c0_208 = arith.constant 0 : index
    %210 = vector.load %arg7[%c4_206, %c0_207, %c0_208] : memref<5x56x40xf32, #tpu.memory_space<vmem>>, vector<1x56x40xf32>
    %211 = vector.shape_cast %210 : vector<1x56x40xf32> to vector<56x40xf32>
    %cst_209 = arith.constant dense<0.000000e+00> : vector<5x40xf32>
    %212 = tpu.matmul %204, %211, %cst_209 {dimension_numbers = #tpu.dot_dimension_numbers<[1], [0], [0], [1], [0, 0, 1, 1], [], []>} : vector<5x56xf32>, vector<56x40xf32>, vector<5x40xf32> -> vector<5x40xf32>
    %213 = arith.addf %195, %212 : vector<5x40xf32>
    %c4_210 = arith.constant 4 : index
    %c0_211 = arith.constant 0 : index
    %c0_212 = arith.constant 0 : index
    %214 = vector.load %arg6[%c4_210, %c0_211, %c0_212] : memref<5x56x40xf32, #tpu.memory_space<vmem>>, vector<1x56x40xf32>
    %215 = vector.shape_cast %214 : vector<1x56x40xf32> to vector<56x40xf32>
    %cst_213 = arith.constant dense<0.000000e+00> : vector<5x40xf32>
    %216 = tpu.matmul %205, %215, %cst_213 {dimension_numbers = #tpu.dot_dimension_numbers<[1], [0], [0], [1], [0, 0, 1, 1], [], []>} : vector<5x56xf32>, vector<56x40xf32>, vector<5x40xf32> -> vector<5x40xf32>
    %217 = arith.addf %199, %216 : vector<5x40xf32>
    %c4_214 = arith.constant 4 : index
    %c0_215 = arith.constant 0 : index
    %c0_216 = arith.constant 0 : index
    %218 = vector.load %arg7[%c4_214, %c0_215, %c0_216] : memref<5x56x40xf32, #tpu.memory_space<vmem>>, vector<1x56x40xf32>
    %219 = vector.shape_cast %218 : vector<1x56x40xf32> to vector<56x40xf32>
    %cst_217 = arith.constant dense<0.000000e+00> : vector<5x40xf32>
    %220 = tpu.matmul %205, %219, %cst_217 {dimension_numbers = #tpu.dot_dimension_numbers<[1], [0], [0], [1], [0, 0, 1, 1], [], []>} : vector<5x56xf32>, vector<56x40xf32>, vector<5x40xf32> -> vector<5x40xf32>
    %221 = arith.addf %203, %220 : vector<5x40xf32>
    %c0_218 = arith.constant 0 : index
    %c0_219 = arith.constant 0 : index
    %222 = vector.load %arg8[%c0_218, %c0_219] : memref<1x40xf32, #tpu.memory_space<vmem>>, vector<1x40xf32>
    %c0_220 = arith.constant 0 : index
    %c0_221 = arith.constant 0 : index
    %223 = vector.load %arg9[%c0_220, %c0_221] : memref<1x40xf32, #tpu.memory_space<vmem>>, vector<1x40xf32>
    %224 = vector.broadcast %222 : vector<1x40xf32> to vector<5x40xf32>
    %225 = arith.mulf %209, %224 : vector<5x40xf32>
    %226 = vector.broadcast %223 : vector<1x40xf32> to vector<5x40xf32>
    %227 = arith.addf %225, %226 : vector<5x40xf32>
    %228 = vector.broadcast %222 : vector<1x40xf32> to vector<5x40xf32>
    %229 = arith.mulf %213, %228 : vector<5x40xf32>
    %230 = vector.broadcast %223 : vector<1x40xf32> to vector<5x40xf32>
    %231 = arith.addf %229, %230 : vector<5x40xf32>
    %232 = arith.maximumf %227, %231 : vector<5x40xf32>
    %233 = vector.broadcast %222 : vector<1x40xf32> to vector<5x40xf32>
    %234 = arith.mulf %217, %233 : vector<5x40xf32>
    %235 = vector.broadcast %223 : vector<1x40xf32> to vector<5x40xf32>
    %236 = arith.addf %234, %235 : vector<5x40xf32>
    %237 = vector.broadcast %222 : vector<1x40xf32> to vector<5x40xf32>
    %238 = arith.mulf %221, %237 : vector<5x40xf32>
    %239 = vector.broadcast %223 : vector<1x40xf32> to vector<5x40xf32>
    %240 = arith.addf %238, %239 : vector<5x40xf32>
    %241 = arith.maximumf %236, %240 : vector<5x40xf32>
    %242 = arith.maximumf %232, %241 : vector<5x40xf32>
    %cst_222 = arith.constant 0.000000e+00 : f32
    %243 = vector.broadcast %cst_222 : f32 to vector<5x40xf32>
    %244 = arith.maximumf %242, %243 : vector<5x40xf32>
    %c0_223 = arith.constant 0 : index
    %c0_224 = arith.constant 0 : index
    %245 = vector.load %arg14[%c0_223, %c0_224] : memref<5x40xf32, #tpu.memory_space<vmem>>, vector<5x40xf32>
    tpu.vector_store %arg14[%c0_223, %c0_224], %244 {strides = array<i32>} : memref<5x40xf32, #tpu.memory_space<vmem>>, vector<5x40xf32>,
    %cst_225 = arith.constant 0.000000e+00 : f32
    %246 = vector.broadcast %cst_225 : f32 to vector<1x64xf32>
    %c0_226 = arith.constant 0 : index
    %c0_227 = arith.constant 0 : index
    %247 = vector.load %arg14[%c0_226, %c0_227] : memref<5x40xf32, #tpu.memory_space<vmem>>, vector<1x40xf32>
    %c0_228 = arith.constant 0 : index
    %c0_229 = arith.constant 0 : index
    %c0_230 = arith.constant 0 : index
    %248 = vector.load %arg10[%c0_228, %c0_229, %c0_230] : memref<5x40x64xf32, #tpu.memory_space<vmem>>, vector<1x40x64xf32>
    %249 = vector.shape_cast %248 : vector<1x40x64xf32> to vector<40x64xf32>
    %cst_231 = arith.constant dense<0.000000e+00> : vector<1x64xf32>
    %250 = tpu.matmul %247, %249, %cst_231 {dimension_numbers = #tpu.dot_dimension_numbers<[1], [0], [0], [1], [0, 0, 1, 1], [], []>} : vector<1x40xf32>, vector<40x64xf32>, vector<1x64xf32> -> vector<1x64xf32>
    %251 = arith.addf %246, %250 : vector<1x64xf32>
    %c1_232 = arith.constant 1 : index
    %c0_233 = arith.constant 0 : index
    %252 = vector.load %arg14[%c1_232, %c0_233] : memref<5x40xf32, #tpu.memory_space<vmem>>, vector<1x40xf32>
    %c1_234 = arith.constant 1 : index
    %c0_235 = arith.constant 0 : index
    %c0_236 = arith.constant 0 : index
    %253 = vector.load %arg10[%c1_234, %c0_235, %c0_236] : memref<5x40x64xf32, #tpu.memory_space<vmem>>, vector<1x40x64xf32>
    %254 = vector.shape_cast %253 : vector<1x40x64xf32> to vector<40x64xf32>
    %cst_237 = arith.constant dense<0.000000e+00> : vector<1x64xf32>
    %255 = tpu.matmul %252, %254, %cst_237 {dimension_numbers = #tpu.dot_dimension_numbers<[1], [0], [0], [1], [0, 0, 1, 1], [], []>} : vector<1x40xf32>, vector<40x64xf32>, vector<1x64xf32> -> vector<1x64xf32>
    %256 = arith.addf %251, %255 : vector<1x64xf32>
    %c2_238 = arith.constant 2 : index
    %c0_239 = arith.constant 0 : index
    %257 = vector.load %arg14[%c2_238, %c0_239] : memref<5x40xf32, #tpu.memory_space<vmem>>, vector<1x40xf32>
    %c2_240 = arith.constant 2 : index
    %c0_241 = arith.constant 0 : index
    %c0_242 = arith.constant 0 : index
    %258 = vector.load %arg10[%c2_240, %c0_241, %c0_242] : memref<5x40x64xf32, #tpu.memory_space<vmem>>, vector<1x40x64xf32>
    %259 = vector.shape_cast %258 : vector<1x40x64xf32> to vector<40x64xf32>
    %cst_243 = arith.constant dense<0.000000e+00> : vector<1x64xf32>
    %260 = tpu.matmul %257, %259, %cst_243 {dimension_numbers = #tpu.dot_dimension_numbers<[1], [0], [0], [1], [0, 0, 1, 1], [], []>} : vector<1x40xf32>, vector<40x64xf32>, vector<1x64xf32> -> vector<1x64xf32>
    %261 = arith.addf %256, %260 : vector<1x64xf32>
    %c3_244 = arith.constant 3 : index
    %c0_245 = arith.constant 0 : index
    %262 = vector.load %arg14[%c3_244, %c0_245] : memref<5x40xf32, #tpu.memory_space<vmem>>, vector<1x40xf32>
    %c3_246 = arith.constant 3 : index
    %c0_247 = arith.constant 0 : index
    %c0_248 = arith.constant 0 : index
    %263 = vector.load %arg10[%c3_246, %c0_247, %c0_248] : memref<5x40x64xf32, #tpu.memory_space<vmem>>, vector<1x40x64xf32>
    %264 = vector.shape_cast %263 : vector<1x40x64xf32> to vector<40x64xf32>
    %cst_249 = arith.constant dense<0.000000e+00> : vector<1x64xf32>
    %265 = tpu.matmul %262, %264, %cst_249 {dimension_numbers = #tpu.dot_dimension_numbers<[1], [0], [0], [1], [0, 0, 1, 1], [], []>} : vector<1x40xf32>, vector<40x64xf32>, vector<1x64xf32> -> vector<1x64xf32>
    %266 = arith.addf %261, %265 : vector<1x64xf32>
    %c4_250 = arith.constant 4 : index
    %c0_251 = arith.constant 0 : index
    %267 = vector.load %arg14[%c4_250, %c0_251] : memref<5x40xf32, #tpu.memory_space<vmem>>, vector<1x40xf32>
    %c4_252 = arith.constant 4 : index
    %c0_253 = arith.constant 0 : index
    %c0_254 = arith.constant 0 : index
    %268 = vector.load %arg10[%c4_252, %c0_253, %c0_254] : memref<5x40x64xf32, #tpu.memory_space<vmem>>, vector<1x40x64xf32>
    %269 = vector.shape_cast %268 : vector<1x40x64xf32> to vector<40x64xf32>
    %cst_255 = arith.constant dense<0.000000e+00> : vector<1x64xf32>
    %270 = tpu.matmul %267, %269, %cst_255 {dimension_numbers = #tpu.dot_dimension_numbers<[1], [0], [0], [1], [0, 0, 1, 1], [], []>} : vector<1x40xf32>, vector<40x64xf32>, vector<1x64xf32> -> vector<1x64xf32>
    %271 = arith.addf %266, %270 : vector<1x64xf32>
    %c0_256 = arith.constant 0 : index
    %c0_257 = arith.constant 0 : index
    %272 = vector.load %arg11[%c0_256, %c0_257] : memref<1x64xf32, #tpu.memory_space<vmem>>, vector<1x64xf32>
    %273 = arith.addf %271, %272 : vector<1x64xf32>
    %cst_258 = arith.constant 0.000000e+00 : f32
    %274 = vector.broadcast %cst_258 : f32 to vector<1x64xf32>
    %275 = arith.maximumf %273, %274 : vector<1x64xf32>
    %c0_259 = arith.constant 0 : index
    %c0_260 = arith.constant 0 : index
    %c0_261 = arith.constant 0 : index
    %276 = vector.load %arg12[%c0_259, %c0_260, %c0_261] : memref<1x1x64xf32, #tpu.memory_space<vmem>>, vector<1x1x64xf32>
    %277 = vector.shape_cast %276 : vector<1x1x64xf32> to vector<1x64xf32>
    %278 = vector.shape_cast %275 : vector<1x64xf32> to vector<1x1x64xf32>
    tpu.vector_store %arg12[%c0_259, %c0_260, %c0_261], %278 {strides = array<i32>} : memref<1x1x64xf32, #tpu.memory_space<vmem>>, vector<1x1x64xf32>,
    return
  }
  func.func @transform_0(%arg0: i32) -> (i32, i32, i32) {
    %c0_i32 = arith.constant 0 : i32
    %c0_i32_0 = arith.constant 0 : i32
    %c0_i32_1 = arith.constant 0 : i32
    return %arg0, %c0_i32, %c0_i32_0 : i32, i32, i32
  }
  func.func @transform_1(%arg0: i32) -> (i32, i32, i32) {
    %c0_i32 = arith.constant 0 : i32
    %c0_i32_0 = arith.constant 0 : i32
    %c0_i32_1 = arith.constant 0 : i32
    %c0_i32_2 = arith.constant 0 : i32
    return %c0_i32, %c0_i32_0, %c0_i32_1 : i32, i32, i32
  }
  func.func @transform_2(%arg0: i32) -> (i32, i32, i32) {
    %c0_i32 = arith.constant 0 : i32
    %c0_i32_0 = arith.constant 0 : i32
    %c0_i32_1 = arith.constant 0 : i32
    %c0_i32_2 = arith.constant 0 : i32
    return %c0_i32, %c0_i32_0, %c0_i32_1 : i32, i32, i32
  }
  func.func @transform_3(%arg0: i32) -> (i32, i32) {
    %c0_i32 = arith.constant 0 : i32
    %c0_i32_0 = arith.constant 0 : i32
    %c0_i32_1 = arith.constant 0 : i32
    return %c0_i32, %c0_i32_0 : i32, i32
  }
  func.func @transform_4(%arg0: i32) -> (i32, i32) {
    %c0_i32 = arith.constant 0 : i32
    %c0_i32_0 = arith.constant 0 : i32
    %c0_i32_1 = arith.constant 0 : i32
    return %c0_i32, %c0_i32_0 : i32, i32
  }
  func.func @transform_5(%arg0: i32) -> (i32, i32, i32) {
    %c0_i32 = arith.constant 0 : i32
    %c0_i32_0 = arith.constant 0 : i32
    %c0_i32_1 = arith.constant 0 : i32
    %c0_i32_2 = arith.constant 0 : i32
    return %c0_i32, %c0_i32_0, %c0_i32_1 : i32, i32, i32
  }
  func.func @transform_6(%arg0: i32) -> (i32, i32, i32) {
    %c0_i32 = arith.constant 0 : i32
    %c0_i32_0 = arith.constant 0 : i32
    %c0_i32_1 = arith.constant 0 : i32
    %c0_i32_2 = arith.constant 0 : i32
    return %c0_i32, %c0_i32_0, %c0_i32_1 : i32, i32, i32
  }
  func.func @transform_7(%arg0: i32) -> (i32, i32) {
    %c0_i32 = arith.constant 0 : i32
    %c0_i32_0 = arith.constant 0 : i32
    %c0_i32_1 = arith.constant 0 : i32
    return %c0_i32, %c0_i32_0 : i32, i32
  }
  func.func @transform_8(%arg0: i32) -> (i32, i32) {
    %c0_i32 = arith.constant 0 : i32
    %c0_i32_0 = arith.constant 0 : i32
    %c0_i32_1 = arith.constant 0 : i32
    return %c0_i32, %c0_i32_0 : i32, i32
  }
  func.func @transform_9(%arg0: i32) -> (i32, i32, i32) {
    %c0_i32 = arith.constant 0 : i32
    %c0_i32_0 = arith.constant 0 : i32
    %c0_i32_1 = arith.constant 0 : i32
    %c0_i32_2 = arith.constant 0 : i32
    return %c0_i32, %c0_i32_0, %c0_i32_1 : i32, i32, i32
  }
  func.func @transform_10(%arg0: i32) -> (i32, i32) {
    %c0_i32 = arith.constant 0 : i32
    %c0_i32_0 = arith.constant 0 : i32
    %c0_i32_1 = arith.constant 0 : i32
    return %c0_i32, %c0_i32_0 : i32, i32
  }
  func.func @transform_11(%arg0: i32) -> (i32, i32, i32) {
    %c0_i32 = arith.constant 0 : i32
    %c0_i32_0 = arith.constant 0 : i32
    %c0_i32_1 = arith.constant 0 : i32
    return %arg0, %c0_i32, %c0_i32_0 : i32, i32, i32
  }
}

module attributes {stable_mosaic.version = 11 : i64} {
  func.func @_matching_kernel(%arg0: memref<10x64xf32, #tpu.memory_space<vmem>>, %arg1: memref<3x6xf32, #tpu.memory_space<vmem>>, %arg2: memref<3x1xf32, #tpu.memory_space<vmem>>, %arg3: memref<4x3xf32, #tpu.memory_space<vmem>>) attributes {dimension_semantics = [], scalar_prefetch = 0 : i64, scratch_operands = 0 : i64, tpu.core_type = #tpu.core_type<tc>} {
    %c0 = arith.constant 0 : index
    %c0_0 = arith.constant 0 : index
    %0 = vector.load %arg0[%c0, %c0_0] : memref<10x64xf32, #tpu.memory_space<vmem>>, vector<6x64xf32>
    %c6 = arith.constant 6 : index
    %c0_1 = arith.constant 0 : index
    %1 = vector.load %arg0[%c6, %c0_1] : memref<10x64xf32, #tpu.memory_space<vmem>>, vector<4x64xf32>
    %c0_2 = arith.constant 0 : index
    %c0_3 = arith.constant 0 : index
    %2 = vector.load %arg1[%c0_2, %c0_3] : memref<3x6xf32, #tpu.memory_space<vmem>>, vector<3x6xf32>
    %cst = arith.constant dense<0.000000e+00> : vector<3x64xf32>
    %3 = tpu.matmul %2, %0, %cst {dimension_numbers = #tpu.dot_dimension_numbers<[1], [0], [0], [1], [0, 0, 1, 1], [], []>} : vector<3x6xf32>, vector<6x64xf32>, vector<3x64xf32> -> vector<3x64xf32>
    %c0_4 = arith.constant 0 : index
    %c0_5 = arith.constant 0 : index
    %4 = vector.load %arg2[%c0_4, %c0_5] : memref<3x1xf32, #tpu.memory_space<vmem>>, vector<3x1xf32>
    %cst_6 = arith.constant 1.000000e+00 : f32
    %5 = vector.broadcast %cst_6 : f32 to vector<3x1xf32>
    %6 = arith.maximumf %4, %5 : vector<3x1xf32>
    %7 = vector.broadcast %6 : vector<3x1xf32> to vector<3x64xf32>
    %8 = arith.divf %3, %7 : vector<3x64xf32>
    %9 = arith.mulf %1, %1 : vector<4x64xf32>
    %cst_7 = arith.constant dense<0.000000e+00> : vector<4xf32>
    %10 = vector.multi_reduction <add>, %9, %cst_7 [1] : vector<4x64xf32> to vector<4xf32>
    %11 = vector.shape_cast %10 : vector<4xf32> to vector<4x1xf32>
    %12 = math.sqrt %11 : vector<4x1xf32>
    %cst_8 = arith.constant 9.99999993E-9 : f32
    %13 = vector.broadcast %cst_8 : f32 to vector<4x1xf32>
    %14 = arith.maximumf %12, %13 : vector<4x1xf32>
    %15 = arith.mulf %8, %8 : vector<3x64xf32>
    %cst_9 = arith.constant dense<0.000000e+00> : vector<3xf32>
    %16 = vector.multi_reduction <add>, %15, %cst_9 [1] : vector<3x64xf32> to vector<3xf32>
    %17 = vector.shape_cast %16 : vector<3xf32> to vector<3x1xf32>
    %18 = math.sqrt %17 : vector<3x1xf32>
    %cst_10 = arith.constant 9.99999993E-9 : f32
    %19 = vector.broadcast %cst_10 : f32 to vector<3x1xf32>
    %20 = arith.maximumf %18, %19 : vector<3x1xf32>
    %21 = vector.broadcast %14 : vector<4x1xf32> to vector<4x64xf32>
    %22 = arith.divf %1, %21 : vector<4x64xf32>
    %23 = vector.broadcast %20 : vector<3x1xf32> to vector<3x64xf32>
    %24 = arith.divf %8, %23 : vector<3x64xf32>
    %cst_11 = arith.constant dense<0.000000e+00> : vector<4x3xf32>
    %25 = tpu.matmul %22, %24, %cst_11 {dimension_numbers = #tpu.dot_dimension_numbers<[1], [1], [0], [0], [0, 0, 1, 0], [], []>} : vector<4x64xf32>, vector<3x64xf32>, vector<4x3xf32> -> vector<4x3xf32>
    %c0_12 = arith.constant 0 : index
    %c0_13 = arith.constant 0 : index
    %26 = vector.load %arg3[%c0_12, %c0_13] : memref<4x3xf32, #tpu.memory_space<vmem>>, vector<4x3xf32>
    tpu.vector_store %arg3[%c0_12, %c0_13], %25 {strides = array<i32>} : memref<4x3xf32, #tpu.memory_space<vmem>>, vector<4x3xf32>,
    return
  }
}

</mosaic_0001>

<llo_original>
// kernel: matching_lenet_forward.3
$region0: #{matching_lenet_forward.3}
  #allocation0 [shape = 'u32[]', space=smem, size = 0x4, offset = 0x4, fixed_abs, tag = 'smem constant byte address 0x4 - core index']
  #allocation1 [shape = 'u32[72,128]{1,0:T(1,128)}', space=vmem, size = 0x9000, scoped, tag = 'internal scratch']
  %s0 = inlined_call_operand.vmem [shape: f32[10,64], index: 0, kind: input, shape index: {}]
  %s1 = inlined_call_operand.vmem [shape: f32[3,6], index: 1, kind: input, shape index: {}]
  %s2 = inlined_call_operand.vmem [shape: f32[3,1], index: 2, kind: input, shape index: {}]
  %s3 = inlined_call_operand.hbm [shape: f32[4,3], index: 3, kind: output, shape index: {}]
  %s4 = sld [smem:[#allocation0]]
  $region22: #{matching_lenet_forward.3} parent=0
    _
  %s6 = ssub.s32 1, %s4
  %s7 = scalar_select 0, %s6, %s4
  $region1: #{matching_lenet_forward.3} parent=0
    #allocation2 [shape = 'u8[2048]{0}', space=vmem, size = 0x800, scoped, tag = 'output window, operand 0, single buffered']
    #allocation3 [shape = 's32[1]{0}', space=sflag, size = 0x4, scoped, tag = 'scoped memory for matching_lenet_forward.3']
    %8 = vsyncpa [#allocation3], 0
    // Predicated region
    $region2: #{matching_lenet_forward.3} parent=1 // pred_check
      _
    $region3: #{matching_lenet_forward.3} parent=1 // pred_check_branch
      %10 = sbr.rel (0) target = $region5
    $region4: #{matching_lenet_forward.3} parent=1 // pred_region
      _
    $region5: #{matching_lenet_forward.3} parent=1 // pred_fallthru
      _
    // Predicated region
    $region6: #{matching_lenet_forward.3} parent=1 // pred_check
      _
    $region7: #{matching_lenet_forward.3} parent=1 // pred_check_branch
      %12 = sbr.rel (0) target = $region9
    $region8: #{matching_lenet_forward.3} parent=1 // pred_region
      _
    $region9: #{matching_lenet_forward.3} parent=1 // pred_fallthru
      _
    // Predicated region
    $region10: #{matching_lenet_forward.3} parent=1 // pred_check
      _
    $region11: #{matching_lenet_forward.3} parent=1 // pred_check_branch
      %14 = sbr.rel (0) target = $region13
    $region12: #{matching_lenet_forward.3} parent=1 // pred_region
      _
    $region13: #{matching_lenet_forward.3} parent=1 // pred_fallthru
      _
    %v15 = vld [vmem:[%s0] sm:$0x3f]
    %v16 = vld [vmem:[%s0 + $0x6] sm:$0xf]
    %v17 = vld [vmem:[%s1] sm:$0x7]
    %vm18 = vcmask 48128
    %v20 = vsel %vm18, %v17, 0
    %vm22 = vcmask 1045504
    %v24 = vsel %vm22, %v15, 0
    %26 = vmatpush.msra.mxu0 0.0
    %27 = vmatpush.msra.mxu0 0.0
    %28 = vmatpush.msra.mxu0 0.0
    %29 = vmatpush.msra.mxu0 0.0
    %30 = vmatpush.msra.mxu0 0.0
    %31 = vmatpush.msra.mxu0 0.0
    %32 = vmatpush.msra.mxu0 0.0
    %33 = vmatpush.msra.mxu0 0.0
    %34 = vmatpush.msra.mxu0 0.0
    %35 = vmatpush.msra.mxu0 0.0
    %36 = vmatpush.msra.mxu0 0.0
    %37 = vmatpush.msra.mxu0 0.0
    %38 = vmatpush.msra.mxu0 0.0
    %39 = vmatpush.msra.mxu0 0.0
    %40 = vmatpush.msra.mxu0 0.0
    %41 = vmatpush.msra.mxu0 %v24
    %42 = vmatmul.f32.gmra.mxu0 %v20
    %v43 = vpop.f32.mrf.mxu0
    %v44 = vadd.f32 0.0, %v43
    %45 = vdwg.mxu0
    %v46 = vld [vmem:[%s2] sm:$0x7]
    %v47 = vmax.f32 %v46, 1.0
    %49 = vset.pattern.permute.xlu0 0
    %50 = vperm.xlu0 %49, %v47
    %v51 = vpop.permute.xlu0 %50
    %v53 = vrcp.pop %v51
    %v54 = vmul.f32 %v51, %v53
    %v55 = vsub.f32 1.0, %v54
    %v56 = vmul.f32 %v53, %v55
    %v57 = vadd.f32 %v53, %v56
    %vm58 = vweird.f32 %v51
    %vm59 = vweird.f32 %v53
    %vm60 = vmor %vm58, %vm59
    %v61 = vsel %vm60, %v53, %v57
    %v62 = vand.u32 2147483647, %v51
    %vm63 = vcmp.eq.f32.partialorder %v62, 8.507059e+37
    %v64 = vand.u32 %v51, 2147483648
    %v65 = vor.u32 1.1754944e-38, %v64
    %v66 = vsel %vm63, %v65, %v61
    %v67 = vmul.f32 %v44, %v66
    %v68 = vmul.f32 %v16, %v16
    %vm69 = vcmask 519168
    %v70 = vsel %vm69, %v68, 0.0
    %71 = vadd.xlane.f32.xlu0 %v70
    %v72 = vpop.xlane.xlu0 %71
    %v73 = vrsqrt.pop %v72
    %v74 = vmul.f32 %v73, %v72
    %v75 = vmul.f32 %v74, %v73
    %v76 = vmul.f32 0.5, %v75
    %v77 = vsub.f32 1.5, %v76
    %v78 = vmul.f32 %v73, %v77
    %v79 = vmul.f32 %v72, %v78
    %vm80 = vcmp.eq.f32.partialorder %v72, inf
    %v81 = vsel %vm80, %v72, %v79
    %vm82 = vcmp.eq.f32.partialorder %v72, 0.0
    %v83 = vand.u32 %v72, 2147483648
    %v84 = vsel %vm82, %v83, %v81
    %v85 = vmax.f32 %v84, 1e-08
    %v86 = vmul.f32 %v67, %v67
    %vm87 = vcmask 518144
    %v88 = vsel %vm87, %v86, 0.0
    %89 = vadd.xlane.f32.xlu0 %v88
    %v90 = vpop.xlane.xlu0 %89
    %v91 = vrsqrt.pop %v90
    %v92 = vmul.f32 %v91, %v90
    %v93 = vmul.f32 %v92, %v91
    %v94 = vmul.f32 0.5, %v93
    %v95 = vsub.f32 1.5, %v94
    %v96 = vmul.f32 %v91, %v95
    %v97 = vmul.f32 %v90, %v96
    %vm98 = vcmp.eq.f32.partialorder %v90, inf
    %v99 = vsel %vm98, %v90, %v97
    %vm100 = vcmp.eq.f32.partialorder %v90, 0.0
    %v101 = vand.u32 %v90, 2147483648
    %v102 = vsel %vm100, %v101, %v99
    %v103 = vmax.f32 %v102, 1e-08
    %v104 = vrcp.pop %v85
    %v105 = vmul.f32 %v85, %v104
    %v106 = vsub.f32 1.0, %v105
    %v107 = vmul.f32 %v104, %v106
    %v108 = vadd.f32 %v104, %v107
    %vm109 = vweird.f32 %v85
    %vm110 = vweird.f32 %v104
    %vm111 = vmor %vm109, %vm110
    %v112 = vsel %vm111, %v104, %v108
    %v113 = vand.u32 2147483647, %v85
    %vm114 = vcmp.eq.f32.partialorder %v113, 8.507059e+37
    %v115 = vand.u32 %v85, 2147483648
    %v116 = vor.u32 1.1754944e-38, %v115
    %v117 = vsel %vm114, %v116, %v112
    %v118 = vmul.f32 %v16, %v117
    %v119 = vrcp.pop %v103
    %v120 = vmul.f32 %v103, %v119
    %v121 = vsub.f32 1.0, %v120
    %v122 = vmul.f32 %v119, %v121
    %v123 = vadd.f32 %v119, %v122
    %vm124 = vweird.f32 %v103
    %vm125 = vweird.f32 %v119
    %vm126 = vmor %vm124, %vm125
    %v127 = vsel %vm126, %v119, %v123
    %v128 = vand.u32 2147483647, %v103
    %vm129 = vcmp.eq.f32.partialorder %v128, 8.507059e+37
    %v130 = vand.u32 %v103, 2147483648
    %v131 = vor.u32 1.1754944e-38, %v130
    %v132 = vsel %vm129, %v131, %v127
    %v133 = vmul.f32 %v67, %v132
    %vm134 = vcmask 523264
    %v136 = vsel %vm134, %v118, 0
    %v139 = vsel %vm134, %v133, 0
    %141 = vmatpush.xpose.msra.mxu0 0.0
    %142 = vmatpush.xpose.msra.mxu0 0.0
    %143 = vmatpush.xpose.msra.mxu0 0.0
    %144 = vmatpush.xpose.msra.mxu0 0.0
    %145 = vmatpush.xpose.msra.mxu0 0.0
    %146 = vmatpush.xpose.msra.mxu0 0.0
    %147 = vmatpush.xpose.msra.mxu0 0.0
    %148 = vmatpush.xpose.msra.mxu0 0.0
    %149 = vmatpush.xpose.msra.mxu0 0.0
    %150 = vmatpush.xpose.msra.mxu0 0.0
    %151 = vmatpush.xpose.msra.mxu0 0.0
    %152 = vmatpush.xpose.msra.mxu0 0.0
    %153 = vmatpush.xpose.msra.mxu0 0.0
    %154 = vmatpush.xpose.msra.mxu0 0.0
    %155 = vmatpush.xpose.msra.mxu0 0.0
    %156 = vmatpush.xpose.msra.mxu0 %v139
    %157 = vmatmul.f32.gmra.mxu0 %v136
    %v158 = vpop.f32.mrf.mxu0
    %v159 = vadd.f32 0.0, %v158
    %160 = vdwg.mxu0
    %vm161 = vcmask 19456
    %162 = vst.msk [vmem:[#allocation2] sm:$0xf] %vm161, %v159
    // Predicated region
    $region14: #{matching_lenet_forward.3} parent=1 // pred_check
      _
    $region15: #{matching_lenet_forward.3} parent=1 // pred_check_branch
      %164 = sbr.rel (0) target = $region17
    $region16: #{matching_lenet_forward.3} parent=1 // pred_region
      %166 = vsyncadd [#allocation3], 0
      %s168 = sshll.u32 [#allocation2], 4
      %s169 = int_to_ptr.vmem [resolvable:$true] %s168
      %s170 = sshll.u32 %s3, 4
      %s171 = int_to_ptr.hbm [resolvable:$true] %s170
      %173 = dma.vmem_to_hbm [thread:$0]  %s169, 64, %s171, [#allocation3]
    $region17: #{matching_lenet_forward.3} parent=1 // pred_fallthru
      _
    // Predicated region
    $region18: #{matching_lenet_forward.3} parent=1 // pred_check
      _
    $region19: #{matching_lenet_forward.3} parent=1 // pred_check_branch
      %175 = sbr.rel (0) target = $region21
    $region20: #{matching_lenet_forward.3} parent=1 // pred_region
      %177 = dma.done [#allocation3], 64
    $region21: #{matching_lenet_forward.3} parent=1 // pred_fallthru
      _
    %178 = vsyncpa [#allocation3], 1

// kernel: matching_lenet_forward.2
$region0: #{matching_lenet_forward.2}
  #allocation0 [shape = 'u32[]', space=smem, size = 0x4, offset = 0x4, fixed_abs, tag = 'smem constant byte address 0x4 - core index']
  #allocation1 [shape = 'u32[72,128]{1,0:T(1,128)}', space=vmem, size = 0x9000, scoped, tag = 'internal scratch']
  #allocation2 [shape = 'f32[14,56]{1,0:T(8,128)}', space=vmem, size = 0x2000, scoped, tag = 'scratch operand']
  #allocation3 [shape = 'f32[5,40]{1,0:T(8,128)}', space=vmem, size = 0x1000, scoped, tag = 'scratch operand']
  %s0 = inlined_call_operand.vmem [shape: f32[10,32,96], index: 0, kind: input, shape index: {}]
  %s1 = inlined_call_operand.vmem [shape: f32[5,96,56], index: 1, kind: input, shape index: {}]
  %s2 = inlined_call_operand.vmem [shape: f32[5,96,56], index: 2, kind: input, shape index: {}]
  %s3 = inlined_call_operand.vmem [shape: f32[1,56], index: 3, kind: input, shape index: {}]
  %s4 = inlined_call_operand.vmem [shape: f32[1,56], index: 4, kind: input, shape index: {}]
  %s5 = inlined_call_operand.vmem [shape: f32[5,56,40], index: 5, kind: input, shape index: {}]
  %s6 = inlined_call_operand.vmem [shape: f32[5,56,40], index: 6, kind: input, shape index: {}]
  %s7 = inlined_call_operand.vmem [shape: f32[1,40], index: 7, kind: input, shape index: {}]
  %s8 = inlined_call_operand.vmem [shape: f32[1,40], index: 8, kind: input, shape index: {}]
  %s9 = inlined_call_operand.vmem [shape: f32[5,40,64], index: 9, kind: input, shape index: {}]
  %s10 = inlined_call_operand.vmem [shape: f32[1,64], index: 10, kind: input, shape index: {}]
  %s11 = inlined_call_operand.vmem [shape: f32[10,1,64], index: 11, kind: output, shape index: {}]
  %s12 = sld [smem:[#allocation0]]
  $region77: #{matching_lenet_forward.2} parent=0
    _
  %s14 = ssub.s32 1, %s12
  %s15 = scalar_select 0, %s14, %s12
  loop: start=0, step=1, limit=12
  $region2: #{matching_lenet_forward.2} parent=0 // loop_pre_header
    _
  $region3: #{matching_lenet_forward.2} parent=0 // loop_header
    %s17 = sphi 0, %s21
    %p18 = scmp.ge.s32.totalorder %s17, 12
    %s27 = sphi 0, %s29
    %s30 = sphi 0, %s27
    %s31 = sphi 0, %s30
    %s47 = sphi 0, %s31
    %s51 = sphi 0, %s51
    %s53 = sphi 0, %s51
    %s54 = sphi 0, %s53
    %s68 = sphi 0, %s54
    %s72 = sphi 0, %s72
    %s74 = sphi 0, %s72
    %s75 = sphi 0, %s74
    %s89 = sphi 0, %s75
    %s93 = sphi 0, %s93
    %s95 = sphi 0, %s93
    %s96 = sphi 0, %s95
    %s110 = sphi 0, %s96
    %s114 = sphi 0, %s114
    %s116 = sphi 0, %s114
    %s117 = sphi 0, %s116
    %s131 = sphi 0, %s117
    %s135 = sphi 0, %s135
    %s137 = sphi 0, %s135
    %s138 = sphi 0, %s137
    %s152 = sphi 0, %s138
    %s156 = sphi 0, %s156
    %s158 = sphi 0, %s156
    %s159 = sphi 0, %s158
    %s173 = sphi 0, %s159
    %s177 = sphi 0, %s177
    %s179 = sphi 0, %s177
    %s180 = sphi 0, %s179
    %s194 = sphi 0, %s180
    %s198 = sphi 0, %s198
    %s200 = sphi 0, %s198
    %s201 = sphi 0, %s200
    %s215 = sphi 0, %s201
    %s219 = sphi 0, %s219
    %s221 = sphi 0, %s219
    %s222 = sphi 0, %s221
    %s236 = sphi 0, %s222
    %s240 = sphi 0, %s240
    %s242 = sphi 0, %s240
    %s243 = sphi 0, %s242
    %s257 = sphi 0, %s243
    %s263 = sphi 0, %s265
    %s266 = sphi 0, %s263
    %s267 = sphi 0, %s266
    %s283 = sphi 0, %s267
  $region4: #{matching_lenet_forward.2} parent=0 // loop_header_branch
    %20 = sbr.rel (%p18) target = $region8
  $region5: #{matching_lenet_forward.2} parent=0 // loop_body
    %s22 = ssub.s32 %s17, 1
    %s23 = ssub.s32 %s17, 2
    %s24 = sadd.s32 %s17, 1
    %s25 = ssub.s32 %s17, %s24
    %p26 = scmp.eq.s32.totalorder %s25, 0
    %s28 = sadd.s32 %s27, 1
    %s29 = scalar_select %p26, %s27, %s28
    %p32 = pneg %p26
    %p33 = scmp.eq.s32.totalorder %s17, 9
    %p34 = por %p32, %p33
    %p35 = scmp.ne.s32.totalorder %s27, %s30
    %p36 = scmp.eq.s32.totalorder %s17, 0
    %p37 = por %p35, %p36
    %p38 = scmp.ne.s32.totalorder %s27, %s30
    %p39 = scmp.eq.s32.totalorder %s22, 9
    %p40 = por %p38, %p39
    %p41 = scmp.ne.s32.totalorder %s30, %s31
    %p42 = scmp.eq.s32.totalorder %s22, 0
    %p43 = por %p41, %p42
    %p44 = scmp.ne.s32.totalorder %s30, %s31
    %p45 = scmp.eq.s32.totalorder %s23, 9
    %p46 = por %p44, %p45
    %p48 = scmp.ne.s32.totalorder %s31, %s47
    %p49 = scmp.eq.s32.totalorder %s23, 0
    %p50 = por %p48, %p49
    %s52 = sadd.s32 %s51, 1
    %p55 = scmp.eq.s32.totalorder %s17, 9
    %p56 = scmp.ne.s32.totalorder %s51, %s53
    %p57 = scmp.eq.s32.totalorder %s17, 0
    %p58 = por %p56, %p57
    %p59 = scmp.ne.s32.totalorder %s51, %s53
    %p60 = scmp.eq.s32.totalorder %s22, 9
    %p61 = por %p59, %p60
    %p62 = scmp.ne.s32.totalorder %s53, %s54
    %p63 = scmp.eq.s32.totalorder %s22, 0
    %p64 = por %p62, %p63
    %p65 = scmp.ne.s32.totalorder %s53, %s54
    %p66 = scmp.eq.s32.totalorder %s23, 9
    %p67 = por %p65, %p66
    %p69 = scmp.ne.s32.totalorder %s54, %s68
    %p70 = scmp.eq.s32.totalorder %s23, 0
    %p71 = por %p69, %p70
    %s73 = sadd.s32 %s72, 1
    %p76 = scmp.eq.s32.totalorder %s17, 9
    %p77 = scmp.ne.s32.totalorder %s72, %s74
    %p78 = scmp.eq.s32.totalorder %s17, 0
    %p79 = por %p77, %p78
    %p80 = scmp.ne.s32.totalorder %s72, %s74
    %p81 = scmp.eq.s32.totalorder %s22, 9
    %p82 = por %p80, %p81
    %p83 = scmp.ne.s32.totalorder %s74, %s75
    %p84 = scmp.eq.s32.totalorder %s22, 0
    %p85 = por %p83, %p84
    %p86 = scmp.ne.s32.totalorder %s74, %s75
    %p87 = scmp.eq.s32.totalorder %s23, 9
    %p88 = por %p86, %p87
    %p90 = scmp.ne.s32.totalorder %s75, %s89
    %p91 = scmp.eq.s32.totalorder %s23, 0
    %p92 = por %p90, %p91
    %s94 = sadd.s32 %s93, 1
    %p97 = scmp.eq.s32.totalorder %s17, 9
    %p98 = scmp.ne.s32.totalorder %s93, %s95
    %p99 = scmp.eq.s32.totalorder %s17, 0
    %p100 = por %p98, %p99
    %p101 = scmp.ne.s32.totalorder %s93, %s95
    %p102 = scmp.eq.s32.totalorder %s22, 9
    %p103 = por %p101, %p102
    %p104 = scmp.ne.s32.totalorder %s95, %s96
    %p105 = scmp.eq.s32.totalorder %s22, 0
    %p106 = por %p104, %p105
    %p107 = scmp.ne.s32.totalorder %s95, %s96
    %p108 = scmp.eq.s32.totalorder %s23, 9
    %p109 = por %p107, %p108
    %p111 = scmp.ne.s32.totalorder %s96, %s110
    %p112 = scmp.eq.s32.totalorder %s23, 0
    %p113 = por %p111, %p112
    %s115 = sadd.s32 %s114, 1
    %p118 = scmp.eq.s32.totalorder %s17, 9
    %p119 = scmp.ne.s32.totalorder %s114, %s116
    %p120 = scmp.eq.s32.totalorder %s17, 0
    %p121 = por %p119, %p120
    %p122 = scmp.ne.s32.totalorder %s114, %s116
    %p123 = scmp.eq.s32.totalorder %s22, 9
    %p124 = por %p122, %p123
    %p125 = scmp.ne.s32.totalorder %s116, %s117
    %p126 = scmp.eq.s32.totalorder %s22, 0
    %p127 = por %p125, %p126
    %p128 = scmp.ne.s32.totalorder %s116, %s117
    %p129 = scmp.eq.s32.totalorder %s23, 9
    %p130 = por %p128, %p129
    %p132 = scmp.ne.s32.totalorder %s117, %s131
    %p133 = scmp.eq.s32.totalorder %s23, 0
    %p134 = por %p132, %p133
    %s136 = sadd.s32 %s135, 1
    %p139 = scmp.eq.s32.totalorder %s17, 9
    %p140 = scmp.ne.s32.totalorder %s135, %s137
    %p141 = scmp.eq.s32.totalorder %s17, 0
    %p142 = por %p140, %p141
    %p143 = scmp.ne.s32.totalorder %s135, %s137
    %p144 = scmp.eq.s32.totalorder %s22, 9
    %p145 = por %p143, %p144
    %p146 = scmp.ne.s32.totalorder %s137, %s138
    %p147 = scmp.eq.s32.totalorder %s22, 0
    %p148 = por %p146, %p147
    %p149 = scmp.ne.s32.totalorder %s137, %s138
    %p150 = scmp.eq.s32.totalorder %s23, 9
    %p151 = por %p149, %p150
    %p153 = scmp.ne.s32.totalorder %s138, %s152
    %p154 = scmp.eq.s32.totalorder %s23, 0
    %p155 = por %p153, %p154
    %s157 = sadd.s32 %s156, 1
    %p160 = scmp.eq.s32.totalorder %s17, 9
    %p161 = scmp.ne.s32.totalorder %s156, %s158
    %p162 = scmp.eq.s32.totalorder %s17, 0
    %p163 = por %p161, %p162
    %p164 = scmp.ne.s32.totalorder %s156, %s158
    %p165 = scmp.eq.s32.totalorder %s22, 9
    %p166 = por %p164, %p165
    %p167 = scmp.ne.s32.totalorder %s158, %s159
    %p168 = scmp.eq.s32.totalorder %s22, 0
    %p169 = por %p167, %p168
    %p170 = scmp.ne.s32.totalorder %s158, %s159
    %p171 = scmp.eq.s32.totalorder %s23, 9
    %p172 = por %p170, %p171
    %p174 = scmp.ne.s32.totalorder %s159, %s173
    %p175 = scmp.eq.s32.totalorder %s23, 0
    %p176 = por %p174, %p175
    %s178 = sadd.s32 %s177, 1
    %p181 = scmp.eq.s32.totalorder %s17, 9
    %p182 = scmp.ne.s32.totalorder %s177, %s179
    %p183 = scmp.eq.s32.totalorder %s17, 0
    %p184 = por %p182, %p183
    %p185 = scmp.ne.s32.totalorder %s177, %s179
    %p186 = scmp.eq.s32.totalorder %s22, 9
    %p187 = por %p185, %p186
    %p188 = scmp.ne.s32.totalorder %s179, %s180
    %p189 = scmp.eq.s32.totalorder %s22, 0
    %p190 = por %p188, %p189
    %p191 = scmp.ne.s32.totalorder %s179, %s180
    %p192 = scmp.eq.s32.totalorder %s23, 9
    %p193 = por %p191, %p192
    %p195 = scmp.ne.s32.totalorder %s180, %s194
    %p196 = scmp.eq.s32.totalorder %s23, 0
    %p197 = por %p195, %p196
    %s199 = sadd.s32 %s198, 1
    %p202 = scmp.eq.s32.totalorder %s17, 9
    %p203 = scmp.ne.s32.totalorder %s198, %s200
    %p204 = scmp.eq.s32.totalorder %s17, 0
    %p205 = por %p203, %p204
    %p206 = scmp.ne.s32.totalorder %s198, %s200
    %p207 = scmp.eq.s32.totalorder %s22, 9
    %p208 = por %p206, %p207
    %p209 = scmp.ne.s32.totalorder %s200, %s201
    %p210 = scmp.eq.s32.totalorder %s22, 0
    %p211 = por %p209, %p210
    %p212 = scmp.ne.s32.totalorder %s200, %s201
    %p213 = scmp.eq.s32.totalorder %s23, 9
    %p214 = por %p212, %p213
    %p216 = scmp.ne.s32.totalorder %s201, %s215
    %p217 = scmp.eq.s32.totalorder %s23, 0
    %p218 = por %p216, %p217
    %s220 = sadd.s32 %s219, 1
    %p223 = scmp.eq.s32.totalorder %s17, 9
    %p224 = scmp.ne.s32.totalorder %s219, %s221
    %p225 = scmp.eq.s32.totalorder %s17, 0
    %p226 = por %p224, %p225
    %p227 = scmp.ne.s32.totalorder %s219, %s221
    %p228 = scmp.eq.s32.totalorder %s22, 9
    %p229 = por %p227, %p228
    %p230 = scmp.ne.s32.totalorder %s221, %s222
    %p231 = scmp.eq.s32.totalorder %s22, 0
    %p232 = por %p230, %p231
    %p233 = scmp.ne.s32.totalorder %s221, %s222
    %p234 = scmp.eq.s32.totalorder %s23, 9
    %p235 = por %p233, %p234
    %p237 = scmp.ne.s32.totalorder %s222, %s236
    %p238 = scmp.eq.s32.totalorder %s23, 0
    %p239 = por %p237, %p238
    %s241 = sadd.s32 %s240, 1
    %p244 = scmp.eq.s32.totalorder %s17, 9
    %p245 = scmp.ne.s32.totalorder %s240, %s242
    %p246 = scmp.eq.s32.totalorder %s17, 0
    %p247 = por %p245, %p246
    %p248 = scmp.ne.s32.totalorder %s240, %s242
    %p249 = scmp.eq.s32.totalorder %s22, 9
    %p250 = por %p248, %p249
    %p251 = scmp.ne.s32.totalorder %s242, %s243
    %p252 = scmp.eq.s32.totalorder %s22, 0
    %p253 = por %p251, %p252
    %p254 = scmp.ne.s32.totalorder %s242, %s243
    %p255 = scmp.eq.s32.totalorder %s23, 9
    %p256 = por %p254, %p255
    %p258 = scmp.ne.s32.totalorder %s243, %s257
    %p259 = scmp.eq.s32.totalorder %s23, 0
    %p260 = por %p258, %p259
    %s261 = ssub.s32 %s17, %s24
    %p262 = scmp.eq.s32.totalorder %s261, 0
    %s264 = sadd.s32 %s263, 1
    %s265 = scalar_select %p262, %s263, %s264
    %p268 = pneg %p262
    %p269 = scmp.eq.s32.totalorder %s17, 9
    %p270 = por %p268, %p269
    %p271 = scmp.ne.s32.totalorder %s263, %s266
    %p272 = scmp.eq.s32.totalorder %s17, 0
    %p273 = por %p271, %p272
    %p274 = scmp.ne.s32.totalorder %s263, %s266
    %p275 = scmp.eq.s32.totalorder %s22, 9
    %p276 = por %p274, %p275
    %p277 = scmp.ne.s32.totalorder %s266, %s267
    %p278 = scmp.eq.s32.totalorder %s22, 0
    %p279 = por %p277, %p278
    %p280 = scmp.ne.s32.totalorder %s266, %s267
    %p281 = scmp.eq.s32.totalorder %s23, 9
    %p282 = por %p280, %p281
    %p284 = scmp.ne.s32.totalorder %s267, %s283
    %p285 = scmp.eq.s32.totalorder %s23, 0
    %p286 = por %p284, %p285
    %p287 = scmp.le.s32.totalorder 1, %s17
    %p288 = scmp.lt.s32.totalorder %s17, 11
    %p289 = pnand %p287, %p288
    %p290 = pneg %p289
    // Predicated region
    $region9: #{matching_lenet_forward.2} parent=5 // pred_check
      _
    $region10: #{matching_lenet_forward.2} parent=5 // pred_check_branch
      %292 = sbr.rel (%p289) target = $region12
    $region11: #{matching_lenet_forward.2} parent=5 // pred_region
      %s293 = ssub.s32 %s17, 1
      // Predicated region
      $region13: #{matching_lenet_forward.2} parent=11 // pred_check
        %p294 = pneg %p64
      $region14: #{matching_lenet_forward.2} parent=11 // pred_check_branch
        %296 = sbr.rel (%p294) target = $region16
      $region15: #{matching_lenet_forward.2} parent=11 // pred_region
        _
      $region16: #{matching_lenet_forward.2} parent=11 // pred_fallthru
        _
      // Predicated region
      $region17: #{matching_lenet_forward.2} parent=11 // pred_check
        %p297 = pneg %p85
      $region18: #{matching_lenet_forward.2} parent=11 // pred_check_branch
        %299 = sbr.rel (%p297) target = $region20
      $region19: #{matching_lenet_forward.2} parent=11 // pred_region
        _
      $region20: #{matching_lenet_forward.2} parent=11 // pred_fallthru
        _
      // Predicated region
      $region21: #{matching_lenet_forward.2} parent=11 // pred_check
        %p300 = pneg %p106
      $region22: #{matching_lenet_forward.2} parent=11 // pred_check_branch
        %302 = sbr.rel (%p300) target = $region24
      $region23: #{matching_lenet_forward.2} parent=11 // pred_region
        _
      $region24: #{matching_lenet_forward.2} parent=11 // pred_fallthru
        _
      // Predicated region
      $region25: #{matching_lenet_forward.2} parent=11 // pred_check
        %p303 = pneg %p127
      $region26: #{matching_lenet_forward.2} parent=11 // pred_check_branch
        %305 = sbr.rel (%p303) target = $region28
      $region27: #{matching_lenet_forward.2} parent=11 // pred_region
        _
      $region28: #{matching_lenet_forward.2} parent=11 // pred_fallthru
        _
      // Predicated region
      $region29: #{matching_lenet_forward.2} parent=11 // pred_check
        %p306 = pneg %p148
      $region30: #{matching_lenet_forward.2} parent=11 // pred_check_branch
        %308 = sbr.rel (%p306) target = $region32
      $region31: #{matching_lenet_forward.2} parent=11 // pred_region
        _
      $region32: #{matching_lenet_forward.2} parent=11 // pred_fallthru
        _
      // Predicated region
      $region33: #{matching_lenet_forward.2} parent=11 // pred_check
        %p309 = pneg %p169
      $region34: #{matching_lenet_forward.2} parent=11 // pred_check_branch
        %311 = sbr.rel (%p309) target = $region36
      $region35: #{matching_lenet_forward.2} parent=11 // pred_region
        _
      $region36: #{matching_lenet_forward.2} parent=11 // pred_fallthru
        _
      // Predicated region
      $region37: #{matching_lenet_forward.2} parent=11 // pred_check
        %p312 = pneg %p190
      $region38: #{matching_lenet_forward.2} parent=11 // pred_check_branch
        %314 = sbr.rel (%p312) target = $region40
      $region39: #{matching_lenet_forward.2} parent=11 // pred_region
        _
      $region40: #{matching_lenet_forward.2} parent=11 // pred_fallthru
        _
      // Predicated region
      $region41: #{matching_lenet_forward.2} parent=11 // pred_check
        %p315 = pneg %p211
      $region42: #{matching_lenet_forward.2} parent=11 // pred_check_branch
        %317 = sbr.rel (%p315) target = $region44
      $region43: #{matching_lenet_forward.2} parent=11 // pred_region
        _
      $region44: #{matching_lenet_forward.2} parent=11 // pred_fallthru
        _
      // Predicated region
      $region45: #{matching_lenet_forward.2} parent=11 // pred_check
        %p318 = pneg %p232
      $region46: #{matching_lenet_forward.2} parent=11 // pred_check_branch
        %320 = sbr.rel (%p318) target = $region48
      $region47: #{matching_lenet_forward.2} parent=11 // pred_region
        _
      $region48: #{matching_lenet_forward.2} parent=11 // pred_fallthru
        _
      // Predicated region
      $region49: #{matching_lenet_forward.2} parent=11 // pred_check
        %p321 = pneg %p253
      $region50: #{matching_lenet_forward.2} parent=11 // pred_check_branch
        %323 = sbr.rel (%p321) target = $region52
      $region51: #{matching_lenet_forward.2} parent=11 // pred_region
        _
      $region52: #{matching_lenet_forward.2} parent=11 // pred_fallthru
        _
    $region12: #{matching_lenet_forward.2} parent=5 // pred_fallthru
      _
    %p324 = scmp.lt.s32.totalorder %s17, 10
    // Predicated region
    $region53: #{matching_lenet_forward.2} parent=5 // pred_check
      %p325 = pneg %p324
    $region54: #{matching_lenet_forward.2} parent=5 // pred_check_branch
      %327 = sbr.rel (%p325) target = $region56
    $region55: #{matching_lenet_forward.2} parent=5 // pred_region
      // Predicated region
      $region57: #{matching_lenet_forward.2} parent=55 // pred_check
        %p328 = pneg %p37
      $region58: #{matching_lenet_forward.2} parent=55 // pred_check_branch
        %330 = sbr.rel (%p328) target = $region60
      $region59: #{matching_lenet_forward.2} parent=55 // pred_region
        %p331 = scmp.lt.s32.totalorder %s17, 9
        %s332 = scalar_select %p331, %s17, 9
        %s333 = smul.addr %s332, 4
        %s334 = smul.addr %s333, 8
        %s335 = scalar_lea.vmem %s0, %s334
      $region60: #{matching_lenet_forward.2} parent=55 // pred_fallthru
        _
    $region56: #{matching_lenet_forward.2} parent=5 // pred_fallthru
      _
    %p336 = scmp.le.s32.totalorder 1, %s17
    %p337 = scmp.lt.s32.totalorder %s17, 11
    %p338 = pnand %p336, %p337
    %p339 = pneg %p338
    // Predicated region
    $region61: #{matching_lenet_forward.2} parent=5 // pred_check
      _
    $region62: #{matching_lenet_forward.2} parent=5 // pred_check_branch
      %341 = sbr.rel (%p338) target = $region64
    $region63: #{matching_lenet_forward.2} parent=5 // pred_region
      %s342 = ssub.s32 %s17, 1
      %p343 = scmp.lt.s32.totalorder %s22, 9
      %s344 = scalar_select %p343, %s22, 9
      %s345 = smul.addr %s344, 4
      %s346 = smul.addr %s345, 8
      %s347 = scalar_lea.vmem %s0, %s346
      %p348 = pneg %p43
      %p349 = pneg %p40
      %p350 = pneg %p64
      %p351 = pneg %p61
      %p352 = pneg %p85
      %p353 = pneg %p82
      %p354 = pneg %p106
      %p355 = pneg %p103
      %p356 = pneg %p127
      %p357 = pneg %p124
      %p358 = pneg %p148
      %p359 = pneg %p145
      %p360 = pneg %p169
      %p361 = pneg %p166
      %p362 = pneg %p190
      %p363 = pneg %p187
      %p364 = pneg %p211
      %p365 = pneg %p208
      %p366 = pneg %p232
      %p367 = pneg %p229
      %p368 = pneg %p253
      %p369 = pneg %p250
      %p370 = pneg %p279
      %p371 = pneg %p276
      %p372 = scmp.lt.s32.totalorder %s22, 9
      %s373 = scalar_select %p372, %s22, 9
      %s374 = scalar_lea.vmem %s11, %s373
      %p375 = scmp.lt.s32.totalorder %s22, 9
      %s376 = scalar_select %p375, %s22, 9
      %s377 = smul.addr %s376, 4
      %s378 = smul.addr %s377, 8
      %s379 = scalar_lea.vmem %s0, %s378
      %p380 = scmp.lt.s32.totalorder %s22, 9
      %s381 = scalar_select %p380, %s22, 9
      %s382 = scalar_lea.vmem %s11, %s381
      %v383 = vld [vmem:[%s379] ss:$2 sm:$0xff]
      %s384 = scalar_lea.vmem %s379, 16
      %v385 = vld [vmem:[%s384] ss:$2 sm:$0x3f]
      %s386 = scalar_lea.vmem %s379, 1
      %v387 = vld [vmem:[%s386] ss:$2 sm:$0xff]
      %s388 = scalar_lea.vmem %s379, 17
      %v389 = vld [vmem:[%s388] ss:$2 sm:$0x3f]
      %v390 = vld [vmem:[%s1] sm:$0xff]
      %v391 = vld [vmem:[%s1 + $0x8] sm:$0xff]
      %v392 = vld [vmem:[%s1 + $0x10] sm:$0xff]
      %v393 = vld [vmem:[%s1 + $0x18] sm:$0xff]
      %v394 = vld [vmem:[%s1 + $0x20] sm:$0xff]
      %v395 = vld [vmem:[%s1 + $0x28] sm:$0xff]
      %v396 = vld [vmem:[%s1 + $0x30] sm:$0xff]
      %v397 = vld [vmem:[%s1 + $0x38] sm:$0xff]
      %v398 = vld [vmem:[%s1 + $0x40] sm:$0xff]
      %v399 = vld [vmem:[%s1 + $0x48] sm:$0xff]
      %v400 = vld [vmem:[%s1 + $0x50] sm:$0xff]
      %v401 = vld [vmem:[%s1 + $0x58] sm:$0xff]
      %v402 = vld [vmem:[%s2] sm:$0xff]
      %v403 = vld [vmem:[%s2 + $0x8] sm:$0xff]
      %v404 = vld [vmem:[%s2 + $0x10] sm:$0xff]
      %v405 = vld [vmem:[%s2 + $0x18] sm:$0xff]
      %v406 = vld [vmem:[%s2 + $0x20] sm:$0xff]
      %v407 = vld [vmem:[%s2 + $0x28] sm:$0xff]
      %v408 = vld [vmem:[%s2 + $0x30] sm:$0xff]
      %v409 = vld [vmem:[%s2 + $0x38] sm:$0xff]
      %v410 = vld [vmem:[%s2 + $0x40] sm:$0xff]
      %v411 = vld [vmem:[%s2 + $0x48] sm:$0xff]
      %v412 = vld [vmem:[%s2 + $0x50] sm:$0xff]
      %v413 = vld [vmem:[%s2 + $0x58] sm:$0xff]
      %s414 = scalar_lea.vmem %s379, 2
      %v415 = vld [vmem:[%s414] ss:$2 sm:$0xff]
      %s416 = scalar_lea.vmem %s379, 18
      %v417 = vld [vmem:[%s416] ss:$2 sm:$0x3f]
      %s418 = scalar_lea.vmem %s1, 96
      %v419 = vld [vmem:[%s418] sm:$0xff]
      %v420 = vld [vmem:[%s418 + $0x8] sm:$0xff]
      %v421 = vld [vmem:[%s418 + $0x10] sm:$0xff]
      %v422 = vld [vmem:[%s418 + $0x18] sm:$0xff]
      %v423 = vld [vmem:[%s418 + $0x20] sm:$0xff]
      %v424 = vld [vmem:[%s418 + $0x28] sm:$0xff]
      %v425 = vld [vmem:[%s418 + $0x30] sm:$0xff]
      %v426 = vld [vmem:[%s418 + $0x38] sm:$0xff]
      %v427 = vld [vmem:[%s418 + $0x40] sm:$0xff]
      %v428 = vld [vmem:[%s418 + $0x48] sm:$0xff]
      %v429 = vld [vmem:[%s418 + $0x50] sm:$0xff]
      %v430 = vld [vmem:[%s418 + $0x58] sm:$0xff]
      %vm431 = vcmask 785408
      %v433 = vsel %vm431, %v387, 0
      %v436 = vsel %vm431, %v389, 0
      %438 = vmatpush.msra.mxu0 0.0
      %439 = vmatpush.msra.mxu0 0.0
      %440 = vmatpush.msra.mxu0 0.0
      %441 = vmatpush.msra.mxu0 0.0
      %442 = vmatpush.msra.mxu0 %v430
      %443 = vmatpush.msra.mxu0 %v429
      %444 = vmatpush.msra.mxu0 %v428
      %445 = vmatpush.msra.mxu0 %v427
      %446 = vmatpush.msra.mxu0 %v426
      %447 = vmatpush.msra.mxu0 %v425
      %448 = vmatpush.msra.mxu0 %v424
      %449 = vmatpush.msra.mxu0 %v423
      %450 = vmatpush.msra.mxu0 %v422
      %451 = vmatpush.msra.mxu0 %v421
      %452 = vmatpush.msra.mxu0 %v420
      %453 = vmatpush.msra.mxu0 %v419
      %454 = vmatmul.f32.gmra.mxu0 %v433
      %v455 = vpop.f32.mrf.mxu0
      %v456 = vadd.f32 0.0, %v455
      %457 = vmatmul.f32.gmra.mxu0 %v436
      %v458 = vpop.f32.mrf.mxu0
      %v459 = vadd.f32 0.0, %v458
      %460 = vdwg.mxu0
      %v462 = vsel %vm431, %v383, 0
      %v465 = vsel %vm431, %v385, 0
      %467 = vmatpush.msra.mxu0 0.0
      %468 = vmatpush.msra.mxu0 0.0
      %469 = vmatpush.msra.mxu0 0.0
      %470 = vmatpush.msra.mxu0 0.0
      %471 = vmatpush.msra.mxu0 %v401
      %472 = vmatpush.msra.mxu0 %v400
      %473 = vmatpush.msra.mxu0 %v399
      %474 = vmatpush.msra.mxu0 %v398
      %475 = vmatpush.msra.mxu0 %v397
      %476 = vmatpush.msra.mxu0 %v396
      %477 = vmatpush.msra.mxu0 %v395
      %478 = vmatpush.msra.mxu0 %v394
      %479 = vmatpush.msra.mxu0 %v393
      %480 = vmatpush.msra.mxu0 %v392
      %481 = vmatpush.msra.mxu0 %v391
      %482 = vmatpush.msra.mxu0 %v390
      %483 = vmatmul.f32.gmra.mxu0 %v462
      %v484 = vpop.f32.mrf.mxu0
      %v485 = vadd.f32 %v456, %v484
      %486 = vmatmul.f32.gmra.mxu0 %v465
      %v487 = vpop.f32.mrf.mxu0
      %v488 = vadd.f32 %v459, %v487
      %489 = vdwg.mxu0
      %s490 = scalar_lea.vmem %s2, 96
      %v491 = vld [vmem:[%s490] sm:$0xff]
      %v492 = vld [vmem:[%s490 + $0x8] sm:$0xff]
      %v493 = vld [vmem:[%s490 + $0x10] sm:$0xff]
      %v494 = vld [vmem:[%s490 + $0x18] sm:$0xff]
      %v495 = vld [vmem:[%s490 + $0x20] sm:$0xff]
      %v496 = vld [vmem:[%s490 + $0x28] sm:$0xff]
      %v497 = vld [vmem:[%s490 + $0x30] sm:$0xff]
      %v498 = vld [vmem:[%s490 + $0x38] sm:$0xff]
      %v499 = vld [vmem:[%s490 + $0x40] sm:$0xff]
      %v500 = vld [vmem:[%s490 + $0x48] sm:$0xff]
      %v501 = vld [vmem:[%s490 + $0x50] sm:$0xff]
      %v502 = vld [vmem:[%s490 + $0x58] sm:$0xff]
      %503 = vmatpush.msra.mxu0 0.0
      %504 = vmatpush.msra.mxu0 0.0
      %505 = vmatpush.msra.mxu0 0.0
      %506 = vmatpush.msra.mxu0 0.0
      %507 = vmatpush.msra.mxu0 %v502
      %508 = vmatpush.msra.mxu0 %v501
      %509 = vmatpush.msra.mxu0 %v500
      %510 = vmatpush.msra.mxu0 %v499
      %511 = vmatpush.msra.mxu0 %v498
      %512 = vmatpush.msra.mxu0 %v497
      %513 = vmatpush.msra.mxu0 %v496
      %514 = vmatpush.msra.mxu0 %v495
      %515 = vmatpush.msra.mxu0 %v494
      %516 = vmatpush.msra.mxu0 %v493
      %517 = vmatpush.msra.mxu0 %v492
      %518 = vmatpush.msra.mxu0 %v491
      %519 = vmatmul.f32.gmra.mxu0 %v433
      %v520 = vpop.f32.mrf.mxu0
      %v521 = vadd.f32 0.0, %v520
      %522 = vmatmul.f32.gmra.mxu0 %v436
      %v523 = vpop.f32.mrf.mxu0
      %v524 = vadd.f32 0.0, %v523
      %525 = vdwg.mxu0
      %526 = vmatpush.msra.mxu0 0.0
      %527 = vmatpush.msra.mxu0 0.0
      %528 = vmatpush.msra.mxu0 0.0
      %529 = vmatpush.msra.mxu0 0.0
      %530 = vmatpush.msra.mxu0 %v413
      %531 = vmatpush.msra.mxu0 %v412
      %532 = vmatpush.msra.mxu0 %v411
      %533 = vmatpush.msra.mxu0 %v410
      %534 = vmatpush.msra.mxu0 %v409
      %535 = vmatpush.msra.mxu0 %v408
      %536 = vmatpush.msra.mxu0 %v407
      %537 = vmatpush.msra.mxu0 %v406
      %538 = vmatpush.msra.mxu0 %v405
      %539 = vmatpush.msra.mxu0 %v404
      %540 = vmatpush.msra.mxu0 %v403
      %541 = vmatpush.msra.mxu0 %v402
      %542 = vmatmul.f32.gmra.mxu0 %v462
      %v543 = vpop.f32.mrf.mxu0
      %v544 = vadd.f32 %v521, %v543
      %545 = vmatmul.f32.gmra.mxu0 %v465
      %v546 = vpop.f32.mrf.mxu0
      %v547 = vadd.f32 %v524, %v546
      %548 = vdwg.mxu0
      %v550 = vsel %vm431, %v415, 0
      %v553 = vsel %vm431, %v417, 0
      %555 = vmatpush.msra.mxu0 0.0
      %556 = vmatpush.msra.mxu0 0.0
      %557 = vmatpush.msra.mxu0 0.0
      %558 = vmatpush.msra.mxu0 0.0
      %559 = vmatpush.msra.mxu0 %v430
      %560 = vmatpush.msra.mxu0 %v429
      %561 = vmatpush.msra.mxu0 %v428
      %562 = vmatpush.msra.mxu0 %v427
      %563 = vmatpush.msra.mxu0 %v426
      %564 = vmatpush.msra.mxu0 %v425
      %565 = vmatpush.msra.mxu0 %v424
      %566 = vmatpush.msra.mxu0 %v423
      %567 = vmatpush.msra.mxu0 %v422
      %568 = vmatpush.msra.mxu0 %v421
      %569 = vmatpush.msra.mxu0 %v420
      %570 = vmatpush.msra.mxu0 %v419
      %571 = vmatmul.f32.gmra.mxu0 %v550
      %v572 = vpop.f32.mrf.mxu0
      %v573 = vadd.f32 0.0, %v572
      %574 = vmatmul.f32.gmra.mxu0 %v553
      %v575 = vpop.f32.mrf.mxu0
      %v576 = vadd.f32 0.0, %v575
      %577 = vdwg.mxu0
      %578 = vmatpush.msra.mxu0 0.0
      %579 = vmatpush.msra.mxu0 0.0
      %580 = vmatpush.msra.mxu0 0.0
      %581 = vmatpush.msra.mxu0 0.0
      %582 = vmatpush.msra.mxu0 %v401
      %583 = vmatpush.msra.mxu0 %v400
      %584 = vmatpush.msra.mxu0 %v399
      %585 = vmatpush.msra.mxu0 %v398
      %586 = vmatpush.msra.mxu0 %v397
      %587 = vmatpush.msra.mxu0 %v396
      %588 = vmatpush.msra.mxu0 %v395
      %589 = vmatpush.msra.mxu0 %v394
      %590 = vmatpush.msra.mxu0 %v393
      %591 = vmatpush.msra.mxu0 %v392
      %592 = vmatpush.msra.mxu0 %v391
      %593 = vmatpush.msra.mxu0 %v390
      %594 = vmatmul.f32.gmra.mxu0 %v433
      %v595 = vpop.f32.mrf.mxu0
      %v596 = vadd.f32 %v573, %v595
      %597 = vmatmul.f32.gmra.mxu0 %v436
      %v598 = vpop.f32.mrf.mxu0
      %v599 = vadd.f32 %v576, %v598
      %600 = vdwg.mxu0
      %601 = vmatpush.msra.mxu0 0.0
      %602 = vmatpush.msra.mxu0 0.0
      %603 = vmatpush.msra.mxu0 0.0
      %604 = vmatpush.msra.mxu0 0.0
      %605 = vmatpush.msra.mxu0 %v502
      %606 = vmatpush.msra.mxu0 %v501
      %607 = vmatpush.msra.mxu0 %v500
      %608 = vmatpush.msra.mxu0 %v499
      %609 = vmatpush.msra.mxu0 %v498
      %610 = vmatpush.msra.mxu0 %v497
      %611 = vmatpush.msra.mxu0 %v496
      %612 = vmatpush.msra.mxu0 %v495
      %613 = vmatpush.msra.mxu0 %v494
      %614 = vmatpush.msra.mxu0 %v493
      %615 = vmatpush.msra.mxu0 %v492
      %616 = vmatpush.msra.mxu0 %v491
      %617 = vmatmul.f32.gmra.mxu0 %v550
      %v618 = vpop.f32.mrf.mxu0
      %v619 = vadd.f32 0.0, %v618
      %620 = vmatmul.f32.gmra.mxu0 %v553
      %v621 = vpop.f32.mrf.mxu0
      %v622 = vadd.f32 0.0, %v621
      %623 = vdwg.mxu0
      %624 = vmatpush.msra.mxu0 0.0
      %625 = vmatpush.msra.mxu0 0.0
      %626 = vmatpush.msra.mxu0 0.0
      %627 = vmatpush.msra.mxu0 0.0
      %628 = vmatpush.msra.mxu0 %v413
      %629 = vmatpush.msra.mxu0 %v412
      %630 = vmatpush.msra.mxu0 %v411
      %631 = vmatpush.msra.mxu0 %v410
      %632 = vmatpush.msra.mxu0 %v409
      %633 = vmatpush.msra.mxu0 %v408
      %634 = vmatpush.msra.mxu0 %v407
      %635 = vmatpush.msra.mxu0 %v406
      %636 = vmatpush.msra.mxu0 %v405
      %637 = vmatpush.msra.mxu0 %v404
      %638 = vmatpush.msra.mxu0 %v403
      %639 = vmatpush.msra.mxu0 %v402
      %640 = vmatmul.f32.gmra.mxu0 %v433
      %v641 = vpop.f32.mrf.mxu0
      %v642 = vadd.f32 %v619, %v641
      %643 = vmatmul.f32.gmra.mxu0 %v436
      %v644 = vpop.f32.mrf.mxu0
      %v645 = vadd.f32 %v622, %v644
      %646 = vdwg.mxu0
      %s647 = scalar_lea.vmem %s379, 3
      %v648 = vld [vmem:[%s647] ss:$2 sm:$0xff]
      %s649 = scalar_lea.vmem %s379, 19
      %v650 = vld [vmem:[%s649] ss:$2 sm:$0x3f]
      %s651 = scalar_lea.vmem %s1, 192
      %v652 = vld [vmem:[%s651] sm:$0xff]
      %v653 = vld [vmem:[%s651 + $0x8] sm:$0xff]
      %v654 = vld [vmem:[%s651 + $0x10] sm:$0xff]
      %v655 = vld [vmem:[%s651 + $0x18] sm:$0xff]
      %v656 = vld [vmem:[%s651 + $0x20] sm:$0xff]
      %v657 = vld [vmem:[%s651 + $0x28] sm:$0xff]
      %v658 = vld [vmem:[%s651 + $0x30] sm:$0xff]
      %v659 = vld [vmem:[%s651 + $0x38] sm:$0xff]
      %v660 = vld [vmem:[%s651 + $0x40] sm:$0xff]
      %v661 = vld [vmem:[%s651 + $0x48] sm:$0xff]
      %v662 = vld [vmem:[%s651 + $0x50] sm:$0xff]
      %v663 = vld [vmem:[%s651 + $0x58] sm:$0xff]
      %664 = vmatpush.msra.mxu0 0.0
      %665 = vmatpush.msra.mxu0 0.0
      %666 = vmatpush.msra.mxu0 0.0
      %667 = vmatpush.msra.mxu0 0.0
      %668 = vmatpush.msra.mxu0 %v663
      %669 = vmatpush.msra.mxu0 %v662
      %670 = vmatpush.msra.mxu0 %v661
      %671 = vmatpush.msra.mxu0 %v660
      %672 = vmatpush.msra.mxu0 %v659
      %673 = vmatpush.msra.mxu0 %v658
      %674 = vmatpush.msra.mxu0 %v657
      %675 = vmatpush.msra.mxu0 %v656
      %676 = vmatpush.msra.mxu0 %v655
      %677 = vmatpush.msra.mxu0 %v654
      %678 = vmatpush.msra.mxu0 %v653
      %679 = vmatpush.msra.mxu0 %v652
      %680 = vmatmul.f32.gmra.mxu0 %v550
      %v681 = vpop.f32.mrf.mxu0
      %v682 = vadd.f32 0.0, %v681
      %683 = vmatmul.f32.gmra.mxu0 %v553
      %v684 = vpop.f32.mrf.mxu0
      %v685 = vadd.f32 0.0, %v684
      %686 = vdwg.mxu0
      %v687 = vadd.f32 %v485, %v682
      %v688 = vadd.f32 %v488, %v685
      %s689 = scalar_lea.vmem %s2, 192
      %v690 = vld [vmem:[%s689] sm:$0xff]
      %v691 = vld [vmem:[%s689 + $0x8] sm:$0xff]
      %v692 = vld [vmem:[%s689 + $0x10] sm:$0xff]
      %v693 = vld [vmem:[%s689 + $0x18] sm:$0xff]
      %v694 = vld [vmem:[%s689 + $0x20] sm:$0xff]
      %v695 = vld [vmem:[%s689 + $0x28] sm:$0xff]
      %v696 = vld [vmem:[%s689 + $0x30] sm:$0xff]
      %v697 = vld [vmem:[%s689 + $0x38] sm:$0xff]
      %v698 = vld [vmem:[%s689 + $0x40] sm:$0xff]
      %v699 = vld [vmem:[%s689 + $0x48] sm:$0xff]
      %v700 = vld [vmem:[%s689 + $0x50] sm:$0xff]
      %v701 = vld [vmem:[%s689 + $0x58] sm:$0xff]
      %702 = vmatpush.msra.mxu0 0.0
      %703 = vmatpush.msra.mxu0 0.0
      %704 = vmatpush.msra.mxu0 0.0
      %705 = vmatpush.msra.mxu0 0.0
      %706 = vmatpush.msra.mxu0 %v701
      %707 = vmatpush.msra.mxu0 %v700
      %708 = vmatpush.msra.mxu0 %v699
      %709 = vmatpush.msra.mxu0 %v698
      %710 = vmatpush.msra.mxu0 %v697
      %711 = vmatpush.msra.mxu0 %v696
      %712 = vmatpush.msra.mxu0 %v695
      %713 = vmatpush.msra.mxu0 %v694
      %714 = vmatpush.msra.mxu0 %v693
      %715 = vmatpush.msra.mxu0 %v692
      %716 = vmatpush.msra.mxu0 %v691
      %717 = vmatpush.msra.mxu0 %v690
      %718 = vmatmul.f32.gmra.mxu0 %v550
      %v719 = vpop.f32.mrf.mxu0
      %v720 = vadd.f32 0.0, %v719
      %721 = vmatmul.f32.gmra.mxu0 %v553
      %v722 = vpop.f32.mrf.mxu0
      %v723 = vadd.f32 0.0, %v722
      %724 = vdwg.mxu0
      %v725 = vadd.f32 %v544, %v720
      %v726 = vadd.f32 %v547, %v723
      %v728 = vsel %vm431, %v648, 0
      %v731 = vsel %vm431, %v650, 0
      %733 = vmatpush.msra.mxu0 0.0
      %734 = vmatpush.msra.mxu0 0.0
      %735 = vmatpush.msra.mxu0 0.0
      %736 = vmatpush.msra.mxu0 0.0
      %737 = vmatpush.msra.mxu0 %v663
      %738 = vmatpush.msra.mxu0 %v662
      %739 = vmatpush.msra.mxu0 %v661
      %740 = vmatpush.msra.mxu0 %v660
      %741 = vmatpush.msra.mxu0 %v659
      %742 = vmatpush.msra.mxu0 %v658
      %743 = vmatpush.msra.mxu0 %v657
      %744 = vmatpush.msra.mxu0 %v656
      %745 = vmatpush.msra.mxu0 %v655
      %746 = vmatpush.msra.mxu0 %v654
      %747 = vmatpush.msra.mxu0 %v653
      %748 = vmatpush.msra.mxu0 %v652
      %749 = vmatmul.f32.gmra.mxu0 %v728
      %v750 = vpop.f32.mrf.mxu0
      %v751 = vadd.f32 0.0, %v750
      %752 = vmatmul.f32.gmra.mxu0 %v731
      %v753 = vpop.f32.mrf.mxu0
      %v754 = vadd.f32 0.0, %v753
      %755 = vdwg.mxu0
      %v756 = vadd.f32 %v596, %v751
      %v757 = vadd.f32 %v599, %v754
      %758 = vmatpush.msra.mxu0 0.0
      %759 = vmatpush.msra.mxu0 0.0
      %760 = vmatpush.msra.mxu0 0.0
      %761 = vmatpush.msra.mxu0 0.0
      %762 = vmatpush.msra.mxu0 %v701
      %763 = vmatpush.msra.mxu0 %v700
      %764 = vmatpush.msra.mxu0 %v699
      %765 = vmatpush.msra.mxu0 %v698
      %766 = vmatpush.msra.mxu0 %v697
      %767 = vmatpush.msra.mxu0 %v696
      %768 = vmatpush.msra.mxu0 %v695
      %769 = vmatpush.msra.mxu0 %v694
      %770 = vmatpush.msra.mxu0 %v693
      %771 = vmatpush.msra.mxu0 %v692
      %772 = vmatpush.msra.mxu0 %v691
      %773 = vmatpush.msra.mxu0 %v690
      %774 = vmatmul.f32.gmra.mxu0 %v728
      %v775 = vpop.f32.mrf.mxu0
      %v776 = vadd.f32 0.0, %v775
      %777 = vmatmul.f32.gmra.mxu0 %v731
      %v778 = vpop.f32.mrf.mxu0
      %v779 = vadd.f32 0.0, %v778
      %780 = vdwg.mxu0
      %v781 = vadd.f32 %v642, %v776
      %v782 = vadd.f32 %v645, %v779
      %s783 = scalar_lea.vmem %s379, 4
      %v784 = vld [vmem:[%s783] ss:$2 sm:$0xff]
      %s785 = scalar_lea.vmem %s379, 20
      %v786 = vld [vmem:[%s785] ss:$2 sm:$0x3f]
      %s787 = scalar_lea.vmem %s1, 288
      %v788 = vld [vmem:[%s787] sm:$0xff]
      %v789 = vld [vmem:[%s787 + $0x8] sm:$0xff]
      %v790 = vld [vmem:[%s787 + $0x10] sm:$0xff]
      %v791 = vld [vmem:[%s787 + $0x18] sm:$0xff]
      %v792 = vld [vmem:[%s787 + $0x20] sm:$0xff]
      %v793 = vld [vmem:[%s787 + $0x28] sm:$0xff]
      %v794 = vld [vmem:[%s787 + $0x30] sm:$0xff]
      %v795 = vld [vmem:[%s787 + $0x38] sm:$0xff]
      %v796 = vld [vmem:[%s787 + $0x40] sm:$0xff]
      %v797 = vld [vmem:[%s787 + $0x48] sm:$0xff]
      %v798 = vld [vmem:[%s787 + $0x50] sm:$0xff]
      %v799 = vld [vmem:[%s787 + $0x58] sm:$0xff]
      %800 = vmatpush.msra.mxu0 0.0
      %801 = vmatpush.msra.mxu0 0.0
      %802 = vmatpush.msra.mxu0 0.0
      %803 = vmatpush.msra.mxu0 0.0
      %804 = vmatpush.msra.mxu0 %v799
      %805 = vmatpush.msra.mxu0 %v798
      %806 = vmatpush.msra.mxu0 %v797
      %807 = vmatpush.msra.mxu0 %v796
      %808 = vmatpush.msra.mxu0 %v795
      %809 = vmatpush.msra.mxu0 %v794
      %810 = vmatpush.msra.mxu0 %v793
      %811 = vmatpush.msra.mxu0 %v792
      %812 = vmatpush.msra.mxu0 %v791
      %813 = vmatpush.msra.mxu0 %v790
      %814 = vmatpush.msra.mxu0 %v789
      %815 = vmatpush.msra.mxu0 %v788
      %816 = vmatmul.f32.gmra.mxu0 %v728
      %v817 = vpop.f32.mrf.mxu0
      %v818 = vadd.f32 0.0, %v817
      %819 = vmatmul.f32.gmra.mxu0 %v731
      %v820 = vpop.f32.mrf.mxu0
      %v821 = vadd.f32 0.0, %v820
      %822 = vdwg.mxu0
      %v823 = vadd.f32 %v687, %v818
      %v824 = vadd.f32 %v688, %v821
      %s825 = scalar_lea.vmem %s2, 288
      %v826 = vld [vmem:[%s825] sm:$0xff]
      %v827 = vld [vmem:[%s825 + $0x8] sm:$0xff]
      %v828 = vld [vmem:[%s825 + $0x10] sm:$0xff]
      %v829 = vld [vmem:[%s825 + $0x18] sm:$0xff]
      %v830 = vld [vmem:[%s825 + $0x20] sm:$0xff]
      %v831 = vld [vmem:[%s825 + $0x28] sm:$0xff]
      %v832 = vld [vmem:[%s825 + $0x30] sm:$0xff]
      %v833 = vld [vmem:[%s825 + $0x38] sm:$0xff]
      %v834 = vld [vmem:[%s825 + $0x40] sm:$0xff]
      %v835 = vld [vmem:[%s825 + $0x48] sm:$0xff]
      %v836 = vld [vmem:[%s825 + $0x50] sm:$0xff]
      %v837 = vld [vmem:[%s825 + $0x58] sm:$0xff]
      %838 = vmatpush.msra.mxu0 0.0
      %839 = vmatpush.msra.mxu0 0.0
      %840 = vmatpush.msra.mxu0 0.0
      %841 = vmatpush.msra.mxu0 0.0
      %842 = vmatpush.msra.mxu0 %v837
      %843 = vmatpush.msra.mxu0 %v836
      %844 = vmatpush.msra.mxu0 %v835
      %845 = vmatpush.msra.mxu0 %v834
      %846 = vmatpush.msra.mxu0 %v833
      %847 = vmatpush.msra.mxu0 %v832
      %848 = vmatpush.msra.mxu0 %v831
      %849 = vmatpush.msra.mxu0 %v830
      %850 = vmatpush.msra.mxu0 %v829
      %851 = vmatpush.msra.mxu0 %v828
      %852 = vmatpush.msra.mxu0 %v827
      %853 = vmatpush.msra.mxu0 %v826
      %854 = vmatmul.f32.gmra.mxu0 %v728
      %v855 = vpop.f32.mrf.mxu0
      %v856 = vadd.f32 0.0, %v855
      %857 = vmatmul.f32.gmra.mxu0 %v731
      %v858 = vpop.f32.mrf.mxu0
      %v859 = vadd.f32 0.0, %v858
      %860 = vdwg.mxu0
      %v861 = vadd.f32 %v725, %v856
      %v862 = vadd.f32 %v726, %v859
      %v864 = vsel %vm431, %v784, 0
      %v867 = vsel %vm431, %v786, 0
      %869 = vmatpush.msra.mxu0 0.0
      %870 = vmatpush.msra.mxu0 0.0
      %871 = vmatpush.msra.mxu0 0.0
      %872 = vmatpush.msra.mxu0 0.0
      %873 = vmatpush.msra.mxu0 %v799
      %874 = vmatpush.msra.mxu0 %v798
      %875 = vmatpush.msra.mxu0 %v797
      %876 = vmatpush.msra.mxu0 %v796
      %877 = vmatpush.msra.mxu0 %v795
      %878 = vmatpush.msra.mxu0 %v794
      %879 = vmatpush.msra.mxu0 %v793
      %880 = vmatpush.msra.mxu0 %v792
      %881 = vmatpush.msra.mxu0 %v791
      %882 = vmatpush.msra.mxu0 %v790
      %883 = vmatpush.msra.mxu0 %v789
      %884 = vmatpush.msra.mxu0 %v788
      %885 = vmatmul.f32.gmra.mxu0 %v864
      %v886 = vpop.f32.mrf.mxu0
      %v887 = vadd.f32 0.0, %v886
      %888 = vmatmul.f32.gmra.mxu0 %v867
      %v889 = vpop.f32.mrf.mxu0
      %v890 = vadd.f32 0.0, %v889
      %891 = vdwg.mxu0
      %v892 = vadd.f32 %v756, %v887
      %v893 = vadd.f32 %v757, %v890
      %894 = vmatpush.msra.mxu0 0.0
      %895 = vmatpush.msra.mxu0 0.0
      %896 = vmatpush.msra.mxu0 0.0
      %897 = vmatpush.msra.mxu0 0.0
      %898 = vmatpush.msra.mxu0 %v837
      %899 = vmatpush.msra.mxu0 %v836
      %900 = vmatpush.msra.mxu0 %v835
      %901 = vmatpush.msra.mxu0 %v834
      %902 = vmatpush.msra.mxu0 %v833
      %903 = vmatpush.msra.mxu0 %v832
      %904 = vmatpush.msra.mxu0 %v831
      %905 = vmatpush.msra.mxu0 %v830
      %906 = vmatpush.msra.mxu0 %v829
      %907 = vmatpush.msra.mxu0 %v828
      %908 = vmatpush.msra.mxu0 %v827
      %909 = vmatpush.msra.mxu0 %v826
      %910 = vmatmul.f32.gmra.mxu0 %v864
      %v911 = vpop.f32.mrf.mxu0
      %v912 = vadd.f32 0.0, %v911
      %913 = vmatmul.f32.gmra.mxu0 %v867
      %v914 = vpop.f32.mrf.mxu0
      %v915 = vadd.f32 0.0, %v914
      %916 = vdwg.mxu0
      %v917 = vadd.f32 %v781, %v912
      %v918 = vadd.f32 %v782, %v915
      %s919 = scalar_lea.vmem %s379, 5
      %v920 = vld [vmem:[%s919] ss:$2 sm:$0xff]
      %s921 = scalar_lea.vmem %s379, 21
      %v922 = vld [vmem:[%s921] ss:$2 sm:$0x3f]
      %s923 = scalar_lea.vmem %s1, 384
      %v924 = vld [vmem:[%s923] sm:$0xff]
      %v925 = vld [vmem:[%s923 + $0x8] sm:$0xff]
      %v926 = vld [vmem:[%s923 + $0x10] sm:$0xff]
      %v927 = vld [vmem:[%s923 + $0x18] sm:$0xff]
      %v928 = vld [vmem:[%s923 + $0x20] sm:$0xff]
      %v929 = vld [vmem:[%s923 + $0x28] sm:$0xff]
      %v930 = vld [vmem:[%s923 + $0x30] sm:$0xff]
      %v931 = vld [vmem:[%s923 + $0x38] sm:$0xff]
      %v932 = vld [vmem:[%s923 + $0x40] sm:$0xff]
      %v933 = vld [vmem:[%s923 + $0x48] sm:$0xff]
      %v934 = vld [vmem:[%s923 + $0x50] sm:$0xff]
      %v935 = vld [vmem:[%s923 + $0x58] sm:$0xff]
      %936 = vmatpush.msra.mxu0 0.0
      %937 = vmatpush.msra.mxu0 0.0
      %938 = vmatpush.msra.mxu0 0.0
      %939 = vmatpush.msra.mxu0 0.0
      %940 = vmatpush.msra.mxu0 %v935
      %941 = vmatpush.msra.mxu0 %v934
      %942 = vmatpush.msra.mxu0 %v933
      %943 = vmatpush.msra.mxu0 %v932
      %944 = vmatpush.msra.mxu0 %v931
      %945 = vmatpush.msra.mxu0 %v930
      %946 = vmatpush.msra.mxu0 %v929
      %947 = vmatpush.msra.mxu0 %v928
      %948 = vmatpush.msra.mxu0 %v927
      %949 = vmatpush.msra.mxu0 %v926
      %950 = vmatpush.msra.mxu0 %v925
      %951 = vmatpush.msra.mxu0 %v924
      %952 = vmatmul.f32.gmra.mxu0 %v864
      %v953 = vpop.f32.mrf.mxu0
      %v954 = vadd.f32 0.0, %v953
      %955 = vmatmul.f32.gmra.mxu0 %v867
      %v956 = vpop.f32.mrf.mxu0
      %v957 = vadd.f32 0.0, %v956
      %958 = vdwg.mxu0
      %v959 = vadd.f32 %v823, %v954
      %v960 = vadd.f32 %v824, %v957
      %s961 = scalar_lea.vmem %s2, 384
      %v962 = vld [vmem:[%s961] sm:$0xff]
      %v963 = vld [vmem:[%s961 + $0x8] sm:$0xff]
      %v964 = vld [vmem:[%s961 + $0x10] sm:$0xff]
      %v965 = vld [vmem:[%s961 + $0x18] sm:$0xff]
      %v966 = vld [vmem:[%s961 + $0x20] sm:$0xff]
      %v967 = vld [vmem:[%s961 + $0x28] sm:$0xff]
      %v968 = vld [vmem:[%s961 + $0x30] sm:$0xff]
      %v969 = vld [vmem:[%s961 + $0x38] sm:$0xff]
      %v970 = vld [vmem:[%s961 + $0x40] sm:$0xff]
      %v971 = vld [vmem:[%s961 + $0x48] sm:$0xff]
      %v972 = vld [vmem:[%s961 + $0x50] sm:$0xff]
      %v973 = vld [vmem:[%s961 + $0x58] sm:$0xff]
      %974 = vmatpush.msra.mxu0 0.0
      %975 = vmatpush.msra.mxu0 0.0
      %976 = vmatpush.msra.mxu0 0.0
      %977 = vmatpush.msra.mxu0 0.0
      %978 = vmatpush.msra.mxu0 %v973
      %979 = vmatpush.msra.mxu0 %v972
      %980 = vmatpush.msra.mxu0 %v971
      %981 = vmatpush.msra.mxu0 %v970
      %982 = vmatpush.msra.mxu0 %v969
      %983 = vmatpush.msra.mxu0 %v968
      %984 = vmatpush.msra.mxu0 %v967
      %985 = vmatpush.msra.mxu0 %v966
      %986 = vmatpush.msra.mxu0 %v965
      %987 = vmatpush.msra.mxu0 %v964
      %988 = vmatpush.msra.mxu0 %v963
      %989 = vmatpush.msra.mxu0 %v962
      %990 = vmatmul.f32.gmra.mxu0 %v864
      %v991 = vpop.f32.mrf.mxu0
      %v992 = vadd.f32 0.0, %v991
      %993 = vmatmul.f32.gmra.mxu0 %v867
      %v994 = vpop.f32.mrf.mxu0
      %v995 = vadd.f32 0.0, %v994
      %996 = vdwg.mxu0
      %v997 = vadd.f32 %v861, %v992
      %v998 = vadd.f32 %v862, %v995
      %v1000 = vsel %vm431, %v920, 0
      %v1003 = vsel %vm431, %v922, 0
      %1005 = vmatpush.msra.mxu0 0.0
      %1006 = vmatpush.msra.mxu0 0.0
      %1007 = vmatpush.msra.mxu0 0.0
      %1008 = vmatpush.msra.mxu0 0.0
      %1009 = vmatpush.msra.mxu0 %v935
      %1010 = vmatpush.msra.mxu0 %v934
      %1011 = vmatpush.msra.mxu0 %v933
      %1012 = vmatpush.msra.mxu0 %v932
      %1013 = vmatpush.msra.mxu0 %v931
      %1014 = vmatpush.msra.mxu0 %v930
      %1015 = vmatpush.msra.mxu0 %v929
      %1016 = vmatpush.msra.mxu0 %v928
      %1017 = vmatpush.msra.mxu0 %v927
      %1018 = vmatpush.msra.mxu0 %v926
      %1019 = vmatpush.msra.mxu0 %v925
      %1020 = vmatpush.msra.mxu0 %v924
      %1021 = vmatmul.f32.gmra.mxu0 %v1000
      %v1022 = vpop.f32.mrf.mxu0
      %v1023 = vadd.f32 0.0, %v1022
      %1024 = vmatmul.f32.gmra.mxu0 %v1003
      %v1025 = vpop.f32.mrf.mxu0
      %v1026 = vadd.f32 0.0, %v1025
      %1027 = vdwg.mxu0
      %v1028 = vadd.f32 %v892, %v1023
      %v1029 = vadd.f32 %v893, %v1026
      %1030 = vmatpush.msra.mxu0 0.0
      %1031 = vmatpush.msra.mxu0 0.0
      %1032 = vmatpush.msra.mxu0 0.0
      %1033 = vmatpush.msra.mxu0 0.0
      %1034 = vmatpush.msra.mxu0 %v973
      %1035 = vmatpush.msra.mxu0 %v972
      %1036 = vmatpush.msra.mxu0 %v971
      %1037 = vmatpush.msra.mxu0 %v970
      %1038 = vmatpush.msra.mxu0 %v969
      %1039 = vmatpush.msra.mxu0 %v968
      %1040 = vmatpush.msra.mxu0 %v967
      %1041 = vmatpush.msra.mxu0 %v966
      %1042 = vmatpush.msra.mxu0 %v965
      %1043 = vmatpush.msra.mxu0 %v964
      %1044 = vmatpush.msra.mxu0 %v963
      %1045 = vmatpush.msra.mxu0 %v962
      %1046 = vmatmul.f32.gmra.mxu0 %v1000
      %v1047 = vpop.f32.mrf.mxu0
      %v1048 = vadd.f32 0.0, %v1047
      %1049 = vmatmul.f32.gmra.mxu0 %v1003
      %v1050 = vpop.f32.mrf.mxu0
      %v1051 = vadd.f32 0.0, %v1050
      %1052 = vdwg.mxu0
      %v1053 = vadd.f32 %v917, %v1048
      %v1054 = vadd.f32 %v918, %v1051
      %v1055 = vld [vmem:[%s3] sm:$0x1]
      %v1056 = vld [vmem:[%s4] sm:$0x1]
      %v1058 = vperm.slane %v1055, 0
      %v1060 = vmul.f32 %v959, %v1058
      %v1061 = vmul.f32 %v960, %v1058
      %v1063 = vperm.slane %v1056, 0
      %v1065 = vadd.f32 %v1060, %v1063
      %v1066 = vadd.f32 %v1061, %v1063
      %v1067 = vmul.f32 %v997, %v1058
      %v1068 = vmul.f32 %v998, %v1058
      %v1069 = vadd.f32 %v1067, %v1063
      %v1070 = vadd.f32 %v1068, %v1063
      %v1071 = vmax.f32 %v1065, %v1069
      %v1072 = vmax.f32 %v1066, %v1070
      %v1073 = vmul.f32 %v1028, %v1058
      %v1074 = vmul.f32 %v1029, %v1058
      %v1075 = vadd.f32 %v1073, %v1063
      %v1076 = vadd.f32 %v1074, %v1063
      %v1077 = vmul.f32 %v1053, %v1058
      %v1078 = vmul.f32 %v1054, %v1058
      %v1079 = vadd.f32 %v1077, %v1063
      %v1080 = vadd.f32 %v1078, %v1063
      %v1081 = vmax.f32 %v1075, %v1079
      %v1082 = vmax.f32 %v1076, %v1080
      %v1083 = vmax.f32 %v1071, %v1081
      %v1084 = vmax.f32 %v1072, %v1082
      %v1085 = vmax.f32 %v1083, 0.0
      %v1086 = vmax.f32 %v1084, 0.0
      %vm1087 = vcmask 457728
      %1088 = vst.msk [vmem:[#allocation2] sm:$0xff] %vm1087, %v1085
      %vm1089 = vcmask 455680
      %1090 = vst.msk [vmem:[#allocation2 + $0x8] sm:$0x3f] %vm1089, %v1086
      %v1091 = vld [vmem:[#allocation2] ss:$2 sm:$0x1f]
      %s1092 = scalar_lea.vmem [#allocation2], 1
      %v1093 = vld [vmem:[%s1092] ss:$2 sm:$0x1f]
      %v1094 = vld [vmem:[%s5] sm:$0xff]
      %v1095 = vld [vmem:[%s5 + $0x8] sm:$0xff]
      %v1096 = vld [vmem:[%s5 + $0x10] sm:$0xff]
      %v1097 = vld [vmem:[%s5 + $0x18] sm:$0xff]
      %v1098 = vld [vmem:[%s5 + $0x20] sm:$0xff]
      %v1099 = vld [vmem:[%s5 + $0x28] sm:$0xff]
      %v1100 = vld [vmem:[%s5 + $0x30] sm:$0xff]
      %v1101 = vld [vmem:[%s6] sm:$0xff]
      %v1102 = vld [vmem:[%s6 + $0x8] sm:$0xff]
      %v1103 = vld [vmem:[%s6 + $0x10] sm:$0xff]
      %v1104 = vld [vmem:[%s6 + $0x18] sm:$0xff]
      %v1105 = vld [vmem:[%s6 + $0x20] sm:$0xff]
      %v1106 = vld [vmem:[%s6 + $0x28] sm:$0xff]
      %v1107 = vld [vmem:[%s6 + $0x30] sm:$0xff]
      %s1108 = scalar_lea.vmem [#allocation2], 2
      %v1109 = vld [vmem:[%s1108] ss:$2 sm:$0x1f]
      %s1110 = scalar_lea.vmem %s5, 56
      %v1111 = vld [vmem:[%s1110] sm:$0xff]
      %v1112 = vld [vmem:[%s1110 + $0x8] sm:$0xff]
      %v1113 = vld [vmem:[%s1110 + $0x10] sm:$0xff]
      %v1114 = vld [vmem:[%s1110 + $0x18] sm:$0xff]
      %v1115 = vld [vmem:[%s1110 + $0x20] sm:$0xff]
      %v1116 = vld [vmem:[%s1110 + $0x28] sm:$0xff]
      %v1117 = vld [vmem:[%s1110 + $0x30] sm:$0xff]
      %v1119 = vsel %vm1087, %v1093, 0
      %1121 = vmatpush.msra.mxu0 0.0
      %1122 = vmatpush.msra.mxu0 0.0
      %1123 = vmatpush.msra.mxu0 0.0
      %1124 = vmatpush.msra.mxu0 0.0
      %1125 = vmatpush.msra.mxu0 0.0
      %1126 = vmatpush.msra.mxu0 0.0
      %1127 = vmatpush.msra.mxu0 0.0
      %1128 = vmatpush.msra.mxu0 0.0
      %1129 = vmatpush.msra.mxu0 0.0
      %1130 = vmatpush.msra.mxu0 %v1117
      %1131 = vmatpush.msra.mxu0 %v1116
      %1132 = vmatpush.msra.mxu0 %v1115
      %1133 = vmatpush.msra.mxu0 %v1114
      %1134 = vmatpush.msra.mxu0 %v1113
      %1135 = vmatpush.msra.mxu0 %v1112
      %1136 = vmatpush.msra.mxu0 %v1111
      %1137 = vmatmul.f32.gmra.mxu0 %v1119
      %v1138 = vpop.f32.mrf.mxu0
      %v1139 = vadd.f32 0.0, %v1138
      %1140 = vdwg.mxu0
      %v1142 = vsel %vm1087, %v1091, 0
      %1144 = vmatpush.msra.mxu0 0.0
      %1145 = vmatpush.msra.mxu0 0.0
      %1146 = vmatpush.msra.mxu0 0.0
      %1147 = vmatpush.msra.mxu0 0.0
      %1148 = vmatpush.msra.mxu0 0.0
      %1149 = vmatpush.msra.mxu0 0.0
      %1150 = vmatpush.msra.mxu0 0.0
      %1151 = vmatpush.msra.mxu0 0.0
      %1152 = vmatpush.msra.mxu0 0.0
      %1153 = vmatpush.msra.mxu0 %v1100
      %1154 = vmatpush.msra.mxu0 %v1099
      %1155 = vmatpush.msra.mxu0 %v1098
      %1156 = vmatpush.msra.mxu0 %v1097
      %1157 = vmatpush.msra.mxu0 %v1096
      %1158 = vmatpush.msra.mxu0 %v1095
      %1159 = vmatpush.msra.mxu0 %v1094
      %1160 = vmatmul.f32.gmra.mxu0 %v1142
      %v1161 = vpop.f32.mrf.mxu0
      %v1162 = vadd.f32 %v1139, %v1161
      %1163 = vdwg.mxu0
      %s1164 = scalar_lea.vmem %s6, 56
      %v1165 = vld [vmem:[%s1164] sm:$0xff]
      %v1166 = vld [vmem:[%s1164 + $0x8] sm:$0xff]
      %v1167 = vld [vmem:[%s1164 + $0x10] sm:$0xff]
      %v1168 = vld [vmem:[%s1164 + $0x18] sm:$0xff]
      %v1169 = vld [vmem:[%s1164 + $0x20] sm:$0xff]
      %v1170 = vld [vmem:[%s1164 + $0x28] sm:$0xff]
      %v1171 = vld [vmem:[%s1164 + $0x30] sm:$0xff]
      %1172 = vmatpush.msra.mxu0 0.0
      %1173 = vmatpush.msra.mxu0 0.0
      %1174 = vmatpush.msra.mxu0 0.0
      %1175 = vmatpush.msra.mxu0 0.0
      %1176 = vmatpush.msra.mxu0 0.0
      %1177 = vmatpush.msra.mxu0 0.0
      %1178 = vmatpush.msra.mxu0 0.0
      %1179 = vmatpush.msra.mxu0 0.0
      %1180 = vmatpush.msra.mxu0 0.0
      %1181 = vmatpush.msra.mxu0 %v1171
      %1182 = vmatpush.msra.mxu0 %v1170
      %1183 = vmatpush.msra.mxu0 %v1169
      %1184 = vmatpush.msra.mxu0 %v1168
      %1185 = vmatpush.msra.mxu0 %v1167
      %1186 = vmatpush.msra.mxu0 %v1166
      %1187 = vmatpush.msra.mxu0 %v1165
      %1188 = vmatmul.f32.gmra.mxu0 %v1119
      %v1189 = vpop.f32.mrf.mxu0
      %v1190 = vadd.f32 0.0, %v1189
      %1191 = vdwg.mxu0
      %1192 = vmatpush.msra.mxu0 0.0
      %1193 = vmatpush.msra.mxu0 0.0
      %1194 = vmatpush.msra.mxu0 0.0
      %1195 = vmatpush.msra.mxu0 0.0
      %1196 = vmatpush.msra.mxu0 0.0
      %1197 = vmatpush.msra.mxu0 0.0
      %1198 = vmatpush.msra.mxu0 0.0
      %1199 = vmatpush.msra.mxu0 0.0
      %1200 = vmatpush.msra.mxu0 0.0
      %1201 = vmatpush.msra.mxu0 %v1107
      %1202 = vmatpush.msra.mxu0 %v1106
      %1203 = vmatpush.msra.mxu0 %v1105
      %1204 = vmatpush.msra.mxu0 %v1104
      %1205 = vmatpush.msra.mxu0 %v1103
      %1206 = vmatpush.msra.mxu0 %v1102
      %1207 = vmatpush.msra.mxu0 %v1101
      %1208 = vmatmul.f32.gmra.mxu0 %v1142
      %v1209 = vpop.f32.mrf.mxu0
      %v1210 = vadd.f32 %v1190, %v1209
      %1211 = vdwg.mxu0
      %v1213 = vsel %vm1087, %v1109, 0
      %1215 = vmatpush.msra.mxu0 0.0
      %1216 = vmatpush.msra.mxu0 0.0
      %1217 = vmatpush.msra.mxu0 0.0
      %1218 = vmatpush.msra.mxu0 0.0
      %1219 = vmatpush.msra.mxu0 0.0
      %1220 = vmatpush.msra.mxu0 0.0
      %1221 = vmatpush.msra.mxu0 0.0
      %1222 = vmatpush.msra.mxu0 0.0
      %1223 = vmatpush.msra.mxu0 0.0
      %1224 = vmatpush.msra.mxu0 %v1117
      %1225 = vmatpush.msra.mxu0 %v1116
      %1226 = vmatpush.msra.mxu0 %v1115
      %1227 = vmatpush.msra.mxu0 %v1114
      %1228 = vmatpush.msra.mxu0 %v1113
      %1229 = vmatpush.msra.mxu0 %v1112
      %1230 = vmatpush.msra.mxu0 %v1111
      %1231 = vmatmul.f32.gmra.mxu0 %v1213
      %v1232 = vpop.f32.mrf.mxu0
      %v1233 = vadd.f32 0.0, %v1232
      %1234 = vdwg.mxu0
      %1235 = vmatpush.msra.mxu0 0.0
      %1236 = vmatpush.msra.mxu0 0.0
      %1237 = vmatpush.msra.mxu0 0.0
      %1238 = vmatpush.msra.mxu0 0.0
      %1239 = vmatpush.msra.mxu0 0.0
      %1240 = vmatpush.msra.mxu0 0.0
      %1241 = vmatpush.msra.mxu0 0.0
      %1242 = vmatpush.msra.mxu0 0.0
      %1243 = vmatpush.msra.mxu0 0.0
      %1244 = vmatpush.msra.mxu0 %v1100
      %1245 = vmatpush.msra.mxu0 %v1099
      %1246 = vmatpush.msra.mxu0 %v1098
      %1247 = vmatpush.msra.mxu0 %v1097
      %1248 = vmatpush.msra.mxu0 %v1096
      %1249 = vmatpush.msra.mxu0 %v1095
      %1250 = vmatpush.msra.mxu0 %v1094
      %1251 = vmatmul.f32.gmra.mxu0 %v1119
      %v1252 = vpop.f32.mrf.mxu0
      %v1253 = vadd.f32 %v1233, %v1252
      %1254 = vdwg.mxu0
      %1255 = vmatpush.msra.mxu0 0.0
      %1256 = vmatpush.msra.mxu0 0.0
      %1257 = vmatpush.msra.mxu0 0.0
      %1258 = vmatpush.msra.mxu0 0.0
      %1259 = vmatpush.msra.mxu0 0.0
      %1260 = vmatpush.msra.mxu0 0.0
      %1261 = vmatpush.msra.mxu0 0.0
      %1262 = vmatpush.msra.mxu0 0.0
      %1263 = vmatpush.msra.mxu0 0.0
      %1264 = vmatpush.msra.mxu0 %v1171
      %1265 = vmatpush.msra.mxu0 %v1170
      %1266 = vmatpush.msra.mxu0 %v1169
      %1267 = vmatpush.msra.mxu0 %v1168
      %1268 = vmatpush.msra.mxu0 %v1167
      %1269 = vmatpush.msra.mxu0 %v1166
      %1270 = vmatpush.msra.mxu0 %v1165
      %1271 = vmatmul.f32.gmra.mxu0 %v1213
      %v1272 = vpop.f32.mrf.mxu0
      %v1273 = vadd.f32 0.0, %v1272
      %1274 = vdwg.mxu0
      %1275 = vmatpush.msra.mxu0 0.0
      %1276 = vmatpush.msra.mxu0 0.0
      %1277 = vmatpush.msra.mxu0 0.0
      %1278 = vmatpush.msra.mxu0 0.0
      %1279 = vmatpush.msra.mxu0 0.0
      %1280 = vmatpush.msra.mxu0 0.0
      %1281 = vmatpush.msra.mxu0 0.0
      %1282 = vmatpush.msra.mxu0 0.0
      %1283 = vmatpush.msra.mxu0 0.0
      %1284 = vmatpush.msra.mxu0 %v1107
      %1285 = vmatpush.msra.mxu0 %v1106
      %1286 = vmatpush.msra.mxu0 %v1105
      %1287 = vmatpush.msra.mxu0 %v1104
      %1288 = vmatpush.msra.mxu0 %v1103
      %1289 = vmatpush.msra.mxu0 %v1102
      %1290 = vmatpush.msra.mxu0 %v1101
      %1291 = vmatmul.f32.gmra.mxu0 %v1119
      %v1292 = vpop.f32.mrf.mxu0
      %v1293 = vadd.f32 %v1273, %v1292
      %1294 = vdwg.mxu0
      %s1295 = scalar_lea.vmem [#allocation2], 3
      %v1296 = vld [vmem:[%s1295] ss:$2 sm:$0x1f]
      %s1297 = scalar_lea.vmem %s5, 112
      %v1298 = vld [vmem:[%s1297] sm:$0xff]
      %v1299 = vld [vmem:[%s1297 + $0x8] sm:$0xff]
      %v1300 = vld [vmem:[%s1297 + $0x10] sm:$0xff]
      %v1301 = vld [vmem:[%s1297 + $0x18] sm:$0xff]
      %v1302 = vld [vmem:[%s1297 + $0x20] sm:$0xff]
      %v1303 = vld [vmem:[%s1297 + $0x28] sm:$0xff]
      %v1304 = vld [vmem:[%s1297 + $0x30] sm:$0xff]
      %1305 = vmatpush.msra.mxu0 0.0
      %1306 = vmatpush.msra.mxu0 0.0
      %1307 = vmatpush.msra.mxu0 0.0
      %1308 = vmatpush.msra.mxu0 0.0
      %1309 = vmatpush.msra.mxu0 0.0
      %1310 = vmatpush.msra.mxu0 0.0
      %1311 = vmatpush.msra.mxu0 0.0
      %1312 = vmatpush.msra.mxu0 0.0
      %1313 = vmatpush.msra.mxu0 0.0
      %1314 = vmatpush.msra.mxu0 %v1304
      %1315 = vmatpush.msra.mxu0 %v1303
      %1316 = vmatpush.msra.mxu0 %v1302
      %1317 = vmatpush.msra.mxu0 %v1301
      %1318 = vmatpush.msra.mxu0 %v1300
      %1319 = vmatpush.msra.mxu0 %v1299
      %1320 = vmatpush.msra.mxu0 %v1298
      %1321 = vmatmul.f32.gmra.mxu0 %v1213
      %v1322 = vpop.f32.mrf.mxu0
      %v1323 = vadd.f32 0.0, %v1322
      %1324 = vdwg.mxu0
      %v1325 = vadd.f32 %v1162, %v1323
      %s1326 = scalar_lea.vmem %s6, 112
      %v1327 = vld [vmem:[%s1326] sm:$0xff]
      %v1328 = vld [vmem:[%s1326 + $0x8] sm:$0xff]
      %v1329 = vld [vmem:[%s1326 + $0x10] sm:$0xff]
      %v1330 = vld [vmem:[%s1326 + $0x18] sm:$0xff]
      %v1331 = vld [vmem:[%s1326 + $0x20] sm:$0xff]
      %v1332 = vld [vmem:[%s1326 + $0x28] sm:$0xff]
      %v1333 = vld [vmem:[%s1326 + $0x30] sm:$0xff]
      %1334 = vmatpush.msra.mxu0 0.0
      %1335 = vmatpush.msra.mxu0 0.0
      %1336 = vmatpush.msra.mxu0 0.0
      %1337 = vmatpush.msra.mxu0 0.0
      %1338 = vmatpush.msra.mxu0 0.0
      %1339 = vmatpush.msra.mxu0 0.0
      %1340 = vmatpush.msra.mxu0 0.0
      %1341 = vmatpush.msra.mxu0 0.0
      %1342 = vmatpush.msra.mxu0 0.0
      %1343 = vmatpush.msra.mxu0 %v1333
      %1344 = vmatpush.msra.mxu0 %v1332
      %1345 = vmatpush.msra.mxu0 %v1331
      %1346 = vmatpush.msra.mxu0 %v1330
      %1347 = vmatpush.msra.mxu0 %v1329
      %1348 = vmatpush.msra.mxu0 %v1328
      %1349 = vmatpush.msra.mxu0 %v1327
      %1350 = vmatmul.f32.gmra.mxu0 %v1213
      %v1351 = vpop.f32.mrf.mxu0
      %v1352 = vadd.f32 0.0, %v1351
      %1353 = vdwg.mxu0
      %v1354 = vadd.f32 %v1210, %v1352
      %v1356 = vsel %vm1087, %v1296, 0
      %1358 = vmatpush.msra.mxu0 0.0
      %1359 = vmatpush.msra.mxu0 0.0
      %1360 = vmatpush.msra.mxu0 0.0
      %1361 = vmatpush.msra.mxu0 0.0
      %1362 = vmatpush.msra.mxu0 0.0
      %1363 = vmatpush.msra.mxu0 0.0
      %1364 = vmatpush.msra.mxu0 0.0
      %1365 = vmatpush.msra.mxu0 0.0
      %1366 = vmatpush.msra.mxu0 0.0
      %1367 = vmatpush.msra.mxu0 %v1304
      %1368 = vmatpush.msra.mxu0 %v1303
      %1369 = vmatpush.msra.mxu0 %v1302
      %1370 = vmatpush.msra.mxu0 %v1301
      %1371 = vmatpush.msra.mxu0 %v1300
      %1372 = vmatpush.msra.mxu0 %v1299
      %1373 = vmatpush.msra.mxu0 %v1298
      %1374 = vmatmul.f32.gmra.mxu0 %v1356
      %v1375 = vpop.f32.mrf.mxu0
      %v1376 = vadd.f32 0.0, %v1375
      %1377 = vdwg.mxu0
      %v1378 = vadd.f32 %v1253, %v1376
      %1379 = vmatpush.msra.mxu0 0.0
      %1380 = vmatpush.msra.mxu0 0.0
      %1381 = vmatpush.msra.mxu0 0.0
      %1382 = vmatpush.msra.mxu0 0.0
      %1383 = vmatpush.msra.mxu0 0.0
      %1384 = vmatpush.msra.mxu0 0.0
      %1385 = vmatpush.msra.mxu0 0.0
      %1386 = vmatpush.msra.mxu0 0.0
      %1387 = vmatpush.msra.mxu0 0.0
      %1388 = vmatpush.msra.mxu0 %v1333
      %1389 = vmatpush.msra.mxu0 %v1332
      %1390 = vmatpush.msra.mxu0 %v1331
      %1391 = vmatpush.msra.mxu0 %v1330
      %1392 = vmatpush.msra.mxu0 %v1329
      %1393 = vmatpush.msra.mxu0 %v1328
      %1394 = vmatpush.msra.mxu0 %v1327
      %1395 = vmatmul.f32.gmra.mxu0 %v1356
      %v1396 = vpop.f32.mrf.mxu0
      %v1397 = vadd.f32 0.0, %v1396
      %1398 = vdwg.mxu0
      %v1399 = vadd.f32 %v1293, %v1397
      %s1400 = scalar_lea.vmem [#allocation2], 4
      %v1401 = vld [vmem:[%s1400] ss:$2 sm:$0x1f]
      %s1402 = scalar_lea.vmem %s5, 168
      %v1403 = vld [vmem:[%s1402] sm:$0xff]
      %v1404 = vld [vmem:[%s1402 + $0x8] sm:$0xff]
      %v1405 = vld [vmem:[%s1402 + $0x10] sm:$0xff]
      %v1406 = vld [vmem:[%s1402 + $0x18] sm:$0xff]
      %v1407 = vld [vmem:[%s1402 + $0x20] sm:$0xff]
      %v1408 = vld [vmem:[%s1402 + $0x28] sm:$0xff]
      %v1409 = vld [vmem:[%s1402 + $0x30] sm:$0xff]
      %1410 = vmatpush.msra.mxu0 0.0
      %1411 = vmatpush.msra.mxu0 0.0
      %1412 = vmatpush.msra.mxu0 0.0
      %1413 = vmatpush.msra.mxu0 0.0
      %1414 = vmatpush.msra.mxu0 0.0
      %1415 = vmatpush.msra.mxu0 0.0
      %1416 = vmatpush.msra.mxu0 0.0
      %1417 = vmatpush.msra.mxu0 0.0
      %1418 = vmatpush.msra.mxu0 0.0
      %1419 = vmatpush.msra.mxu0 %v1409
      %1420 = vmatpush.msra.mxu0 %v1408
      %1421 = vmatpush.msra.mxu0 %v1407
      %1422 = vmatpush.msra.mxu0 %v1406
      %1423 = vmatpush.msra.mxu0 %v1405
      %1424 = vmatpush.msra.mxu0 %v1404
      %1425 = vmatpush.msra.mxu0 %v1403
      %1426 = vmatmul.f32.gmra.mxu0 %v1356
      %v1427 = vpop.f32.mrf.mxu0
      %v1428 = vadd.f32 0.0, %v1427
      %1429 = vdwg.mxu0
      %v1430 = vadd.f32 %v1325, %v1428
      %s1431 = scalar_lea.vmem %s6, 168
      %v1432 = vld [vmem:[%s1431] sm:$0xff]
      %v1433 = vld [vmem:[%s1431 + $0x8] sm:$0xff]
      %v1434 = vld [vmem:[%s1431 + $0x10] sm:$0xff]
      %v1435 = vld [vmem:[%s1431 + $0x18] sm:$0xff]
      %v1436 = vld [vmem:[%s1431 + $0x20] sm:$0xff]
      %v1437 = vld [vmem:[%s1431 + $0x28] sm:$0xff]
      %v1438 = vld [vmem:[%s1431 + $0x30] sm:$0xff]
      %1439 = vmatpush.msra.mxu0 0.0
      %1440 = vmatpush.msra.mxu0 0.0
      %1441 = vmatpush.msra.mxu0 0.0
      %1442 = vmatpush.msra.mxu0 0.0
      %1443 = vmatpush.msra.mxu0 0.0
      %1444 = vmatpush.msra.mxu0 0.0
      %1445 = vmatpush.msra.mxu0 0.0
      %1446 = vmatpush.msra.mxu0 0.0
      %1447 = vmatpush.msra.mxu0 0.0
      %1448 = vmatpush.msra.mxu0 %v1438
      %1449 = vmatpush.msra.mxu0 %v1437
      %1450 = vmatpush.msra.mxu0 %v1436
      %1451 = vmatpush.msra.mxu0 %v1435
      %1452 = vmatpush.msra.mxu0 %v1434
      %1453 = vmatpush.msra.mxu0 %v1433
      %1454 = vmatpush.msra.mxu0 %v1432
      %1455 = vmatmul.f32.gmra.mxu0 %v1356
      %v1456 = vpop.f32.mrf.mxu0
      %v1457 = vadd.f32 0.0, %v1456
      %1458 = vdwg.mxu0
      %v1459 = vadd.f32 %v1354, %v1457
      %v1461 = vsel %vm1087, %v1401, 0
      %1463 = vmatpush.msra.mxu0 0.0
      %1464 = vmatpush.msra.mxu0 0.0
      %1465 = vmatpush.msra.mxu0 0.0
      %1466 = vmatpush.msra.mxu0 0.0
      %1467 = vmatpush.msra.mxu0 0.0
      %1468 = vmatpush.msra.mxu0 0.0
      %1469 = vmatpush.msra.mxu0 0.0
      %1470 = vmatpush.msra.mxu0 0.0
      %1471 = vmatpush.msra.mxu0 0.0
      %1472 = vmatpush.msra.mxu0 %v1409
      %1473 = vmatpush.msra.mxu0 %v1408
      %1474 = vmatpush.msra.mxu0 %v1407
      %1475 = vmatpush.msra.mxu0 %v1406
      %1476 = vmatpush.msra.mxu0 %v1405
      %1477 = vmatpush.msra.mxu0 %v1404
      %1478 = vmatpush.msra.mxu0 %v1403
      %1479 = vmatmul.f32.gmra.mxu0 %v1461
      %v1480 = vpop.f32.mrf.mxu0
      %v1481 = vadd.f32 0.0, %v1480
      %1482 = vdwg.mxu0
      %v1483 = vadd.f32 %v1378, %v1481
      %1484 = vmatpush.msra.mxu0 0.0
      %1485 = vmatpush.msra.mxu0 0.0
      %1486 = vmatpush.msra.mxu0 0.0
      %1487 = vmatpush.msra.mxu0 0.0
      %1488 = vmatpush.msra.mxu0 0.0
      %1489 = vmatpush.msra.mxu0 0.0
      %1490 = vmatpush.msra.mxu0 0.0
      %1491 = vmatpush.msra.mxu0 0.0
      %1492 = vmatpush.msra.mxu0 0.0
      %1493 = vmatpush.msra.mxu0 %v1438
      %1494 = vmatpush.msra.mxu0 %v1437
      %1495 = vmatpush.msra.mxu0 %v1436
      %1496 = vmatpush.msra.mxu0 %v1435
      %1497 = vmatpush.msra.mxu0 %v1434
      %1498 = vmatpush.msra.mxu0 %v1433
      %1499 = vmatpush.msra.mxu0 %v1432
      %1500 = vmatmul.f32.gmra.mxu0 %v1461
      %v1501 = vpop.f32.mrf.mxu0
      %v1502 = vadd.f32 0.0, %v1501
      %1503 = vdwg.mxu0
      %v1504 = vadd.f32 %v1399, %v1502
      %s1505 = scalar_lea.vmem [#allocation2], 5
      %v1506 = vld [vmem:[%s1505] ss:$2 sm:$0x1f]
      %s1507 = scalar_lea.vmem %s5, 224
      %v1508 = vld [vmem:[%s1507] sm:$0xff]
      %v1509 = vld [vmem:[%s1507 + $0x8] sm:$0xff]
      %v1510 = vld [vmem:[%s1507 + $0x10] sm:$0xff]
      %v1511 = vld [vmem:[%s1507 + $0x18] sm:$0xff]
      %v1512 = vld [vmem:[%s1507 + $0x20] sm:$0xff]
      %v1513 = vld [vmem:[%s1507 + $0x28] sm:$0xff]
      %v1514 = vld [vmem:[%s1507 + $0x30] sm:$0xff]
      %1515 = vmatpush.msra.mxu0 0.0
      %1516 = vmatpush.msra.mxu0 0.0
      %1517 = vmatpush.msra.mxu0 0.0
      %1518 = vmatpush.msra.mxu0 0.0
      %1519 = vmatpush.msra.mxu0 0.0
      %1520 = vmatpush.msra.mxu0 0.0
      %1521 = vmatpush.msra.mxu0 0.0
      %1522 = vmatpush.msra.mxu0 0.0
      %1523 = vmatpush.msra.mxu0 0.0
      %1524 = vmatpush.msra.mxu0 %v1514
      %1525 = vmatpush.msra.mxu0 %v1513
      %1526 = vmatpush.msra.mxu0 %v1512
      %1527 = vmatpush.msra.mxu0 %v1511
      %1528 = vmatpush.msra.mxu0 %v1510
      %1529 = vmatpush.msra.mxu0 %v1509
      %1530 = vmatpush.msra.mxu0 %v1508
      %1531 = vmatmul.f32.gmra.mxu0 %v1461
      %v1532 = vpop.f32.mrf.mxu0
      %v1533 = vadd.f32 0.0, %v1532
      %1534 = vdwg.mxu0
      %v1535 = vadd.f32 %v1430, %v1533
      %s1536 = scalar_lea.vmem %s6, 224
      %v1537 = vld [vmem:[%s1536] sm:$0xff]
      %v1538 = vld [vmem:[%s1536 + $0x8] sm:$0xff]
      %v1539 = vld [vmem:[%s1536 + $0x10] sm:$0xff]
      %v1540 = vld [vmem:[%s1536 + $0x18] sm:$0xff]
      %v1541 = vld [vmem:[%s1536 + $0x20] sm:$0xff]
      %v1542 = vld [vmem:[%s1536 + $0x28] sm:$0xff]
      %v1543 = vld [vmem:[%s1536 + $0x30] sm:$0xff]
      %1544 = vmatpush.msra.mxu0 0.0
      %1545 = vmatpush.msra.mxu0 0.0
      %1546 = vmatpush.msra.mxu0 0.0
      %1547 = vmatpush.msra.mxu0 0.0
      %1548 = vmatpush.msra.mxu0 0.0
      %1549 = vmatpush.msra.mxu0 0.0
      %1550 = vmatpush.msra.mxu0 0.0
      %1551 = vmatpush.msra.mxu0 0.0
      %1552 = vmatpush.msra.mxu0 0.0
      %1553 = vmatpush.msra.mxu0 %v1543
      %1554 = vmatpush.msra.mxu0 %v1542
      %1555 = vmatpush.msra.mxu0 %v1541
      %1556 = vmatpush.msra.mxu0 %v1540
      %1557 = vmatpush.msra.mxu0 %v1539
      %1558 = vmatpush.msra.mxu0 %v1538
      %1559 = vmatpush.msra.mxu0 %v1537
      %1560 = vmatmul.f32.gmra.mxu0 %v1461
      %v1561 = vpop.f32.mrf.mxu0
      %v1562 = vadd.f32 0.0, %v1561
      %1563 = vdwg.mxu0
      %v1564 = vadd.f32 %v1459, %v1562
      %v1566 = vsel %vm1087, %v1506, 0
      %1568 = vmatpush.msra.mxu0 0.0
      %1569 = vmatpush.msra.mxu0 0.0
      %1570 = vmatpush.msra.mxu0 0.0
      %1571 = vmatpush.msra.mxu0 0.0
      %1572 = vmatpush.msra.mxu0 0.0
      %1573 = vmatpush.msra.mxu0 0.0
      %1574 = vmatpush.msra.mxu0 0.0
      %1575 = vmatpush.msra.mxu0 0.0
      %1576 = vmatpush.msra.mxu0 0.0
      %1577 = vmatpush.msra.mxu0 %v1514
      %1578 = vmatpush.msra.mxu0 %v1513
      %1579 = vmatpush.msra.mxu0 %v1512
      %1580 = vmatpush.msra.mxu0 %v1511
      %1581 = vmatpush.msra.mxu0 %v1510
      %1582 = vmatpush.msra.mxu0 %v1509
      %1583 = vmatpush.msra.mxu0 %v1508
      %1584 = vmatmul.f32.gmra.mxu0 %v1566
      %v1585 = vpop.f32.mrf.mxu0
      %v1586 = vadd.f32 0.0, %v1585
      %1587 = vdwg.mxu0
      %v1588 = vadd.f32 %v1483, %v1586
      %1589 = vmatpush.msra.mxu0 0.0
      %1590 = vmatpush.msra.mxu0 0.0
      %1591 = vmatpush.msra.mxu0 0.0
      %1592 = vmatpush.msra.mxu0 0.0
      %1593 = vmatpush.msra.mxu0 0.0
      %1594 = vmatpush.msra.mxu0 0.0
      %1595 = vmatpush.msra.mxu0 0.0
      %1596 = vmatpush.msra.mxu0 0.0
      %1597 = vmatpush.msra.mxu0 0.0
      %1598 = vmatpush.msra.mxu0 %v1543
      %1599 = vmatpush.msra.mxu0 %v1542
      %1600 = vmatpush.msra.mxu0 %v1541
      %1601 = vmatpush.msra.mxu0 %v1540
      %1602 = vmatpush.msra.mxu0 %v1539
      %1603 = vmatpush.msra.mxu0 %v1538
      %1604 = vmatpush.msra.mxu0 %v1537
      %1605 = vmatmul.f32.gmra.mxu0 %v1566
      %v1606 = vpop.f32.mrf.mxu0
      %v1607 = vadd.f32 0.0, %v1606
      %1608 = vdwg.mxu0
      %v1609 = vadd.f32 %v1504, %v1607
      %v1610 = vld [vmem:[%s7] sm:$0x1]
      %v1611 = vld [vmem:[%s8] sm:$0x1]
      %v1613 = vperm.slane %v1610, 0
      %v1615 = vmul.f32 %v1535, %v1613
      %v1617 = vperm.slane %v1611, 0
      %v1619 = vadd.f32 %v1615, %v1617
      %v1620 = vmul.f32 %v1564, %v1613
      %v1621 = vadd.f32 %v1620, %v1617
      %v1622 = vmax.f32 %v1619, %v1621
      %v1623 = vmul.f32 %v1588, %v1613
      %v1624 = vadd.f32 %v1623, %v1617
      %v1625 = vmul.f32 %v1609, %v1613
      %v1626 = vadd.f32 %v1625, %v1617
      %v1627 = vmax.f32 %v1624, %v1626
      %v1628 = vmax.f32 %v1622, %v1627
      %v1629 = vmax.f32 %v1628, 0.0
      %vm1630 = vcmask 323584
      %1631 = vst.msk [vmem:[#allocation3] sm:$0x1f] %vm1630, %v1629
      %v1632 = vld [vmem:[#allocation3] sm:$0x1]
      %v1633 = vld [vmem:[%s9] sm:$0xff]
      %v1634 = vld [vmem:[%s9 + $0x8] sm:$0xff]
      %v1635 = vld [vmem:[%s9 + $0x10] sm:$0xff]
      %v1636 = vld [vmem:[%s9 + $0x18] sm:$0xff]
      %v1637 = vld [vmem:[%s9 + $0x20] sm:$0xff]
      %v1638 = vld [vmem:[#allocation3 + $0x1] sm:$0x1]
      %s1639 = scalar_lea.vmem %s9, 40
      %v1640 = vld [vmem:[%s1639] sm:$0xff]
      %v1641 = vld [vmem:[%s1639 + $0x8] sm:$0xff]
      %v1642 = vld [vmem:[%s1639 + $0x10] sm:$0xff]
      %v1643 = vld [vmem:[%s1639 + $0x18] sm:$0xff]
      %v1644 = vld [vmem:[%s1639 + $0x20] sm:$0xff]
      %vm1645 = vcmask 326656
      %v1647 = vsel %vm1645, %v1638, 0
      %1649 = vmatpush.msra.mxu0 0.0
      %1650 = vmatpush.msra.mxu0 0.0
      %1651 = vmatpush.msra.mxu0 0.0
      %1652 = vmatpush.msra.mxu0 0.0
      %1653 = vmatpush.msra.mxu0 0.0
      %1654 = vmatpush.msra.mxu0 0.0
      %1655 = vmatpush.msra.mxu0 0.0
      %1656 = vmatpush.msra.mxu0 0.0
      %1657 = vmatpush.msra.mxu0 0.0
      %1658 = vmatpush.msra.mxu0 0.0
      %1659 = vmatpush.msra.mxu0 0.0
      %1660 = vmatpush.msra.mxu0 %v1644
      %1661 = vmatpush.msra.mxu0 %v1643
      %1662 = vmatpush.msra.mxu0 %v1642
      %1663 = vmatpush.msra.mxu0 %v1641
      %1664 = vmatpush.msra.mxu0 %v1640
      %1665 = vmatmul.f32.gmra.mxu0 %v1647
      %v1666 = vpop.f32.mrf.mxu0
      %v1667 = vadd.f32 0.0, %v1666
      %1668 = vdwg.mxu0
      %v1670 = vsel %vm1645, %v1632, 0
      %1672 = vmatpush.msra.mxu0 0.0
      %1673 = vmatpush.msra.mxu0 0.0
      %1674 = vmatpush.msra.mxu0 0.0
      %1675 = vmatpush.msra.mxu0 0.0
      %1676 = vmatpush.msra.mxu0 0.0
      %1677 = vmatpush.msra.mxu0 0.0
      %1678 = vmatpush.msra.mxu0 0.0
      %1679 = vmatpush.msra.mxu0 0.0
      %1680 = vmatpush.msra.mxu0 0.0
      %1681 = vmatpush.msra.mxu0 0.0
      %1682 = vmatpush.msra.mxu0 0.0
      %1683 = vmatpush.msra.mxu0 %v1637
      %1684 = vmatpush.msra.mxu0 %v1636
      %1685 = vmatpush.msra.mxu0 %v1635
      %1686 = vmatpush.msra.mxu0 %v1634
      %1687 = vmatpush.msra.mxu0 %v1633
      %1688 = vmatmul.f32.gmra.mxu0 %v1670
      %v1689 = vpop.f32.mrf.mxu0
      %v1690 = vadd.f32 %v1667, %v1689
      %1691 = vdwg.mxu0
      %v1692 = vld [vmem:[#allocation3 + $0x2] sm:$0x1]
      %s1693 = scalar_lea.vmem %s9, 80
      %v1694 = vld [vmem:[%s1693] sm:$0xff]
      %v1695 = vld [vmem:[%s1693 + $0x8] sm:$0xff]
      %v1696 = vld [vmem:[%s1693 + $0x10] sm:$0xff]
      %v1697 = vld [vmem:[%s1693 + $0x18] sm:$0xff]
      %v1698 = vld [vmem:[%s1693 + $0x20] sm:$0xff]
      %v1700 = vsel %vm1645, %v1692, 0
      %1702 = vmatpush.msra.mxu0 0.0
      %1703 = vmatpush.msra.mxu0 0.0
      %1704 = vmatpush.msra.mxu0 0.0
      %1705 = vmatpush.msra.mxu0 0.0
      %1706 = vmatpush.msra.mxu0 0.0
      %1707 = vmatpush.msra.mxu0 0.0
      %1708 = vmatpush.msra.mxu0 0.0
      %1709 = vmatpush.msra.mxu0 0.0
      %1710 = vmatpush.msra.mxu0 0.0
      %1711 = vmatpush.msra.mxu0 0.0
      %1712 = vmatpush.msra.mxu0 0.0
      %1713 = vmatpush.msra.mxu0 %v1698
      %1714 = vmatpush.msra.mxu0 %v1697
      %1715 = vmatpush.msra.mxu0 %v1696
      %1716 = vmatpush.msra.mxu0 %v1695
      %1717 = vmatpush.msra.mxu0 %v1694
      %1718 = vmatmul.f32.gmra.mxu0 %v1700
      %v1719 = vpop.f32.mrf.mxu0
      %v1720 = vadd.f32 0.0, %v1719
      %1721 = vdwg.mxu0
      %v1722 = vadd.f32 %v1690, %v1720
      %v1723 = vld [vmem:[#allocation3 + $0x3] sm:$0x1]
      %s1724 = scalar_lea.vmem %s9, 120
      %v1725 = vld [vmem:[%s1724] sm:$0xff]
      %v1726 = vld [vmem:[%s1724 + $0x8] sm:$0xff]
      %v1727 = vld [vmem:[%s1724 + $0x10] sm:$0xff]
      %v1728 = vld [vmem:[%s1724 + $0x18] sm:$0xff]
      %v1729 = vld [vmem:[%s1724 + $0x20] sm:$0xff]
      %v1731 = vsel %vm1645, %v1723, 0
      %1733 = vmatpush.msra.mxu0 0.0
      %1734 = vmatpush.msra.mxu0 0.0
      %1735 = vmatpush.msra.mxu0 0.0
      %1736 = vmatpush.msra.mxu0 0.0
      %1737 = vmatpush.msra.mxu0 0.0
      %1738 = vmatpush.msra.mxu0 0.0
      %1739 = vmatpush.msra.mxu0 0.0
      %1740 = vmatpush.msra.mxu0 0.0
      %1741 = vmatpush.msra.mxu0 0.0
      %1742 = vmatpush.msra.mxu0 0.0
      %1743 = vmatpush.msra.mxu0 0.0
      %1744 = vmatpush.msra.mxu0 %v1729
      %1745 = vmatpush.msra.mxu0 %v1728
      %1746 = vmatpush.msra.mxu0 %v1727
      %1747 = vmatpush.msra.mxu0 %v1726
      %1748 = vmatpush.msra.mxu0 %v1725
      %1749 = vmatmul.f32.gmra.mxu0 %v1731
      %v1750 = vpop.f32.mrf.mxu0
      %v1751 = vadd.f32 0.0, %v1750
      %1752 = vdwg.mxu0
      %v1753 = vadd.f32 %v1722, %v1751
      %v1754 = vld [vmem:[#allocation3 + $0x4] sm:$0x1]
      %s1755 = scalar_lea.vmem %s9, 160
      %v1756 = vld [vmem:[%s1755] sm:$0xff]
      %v1757 = vld [vmem:[%s1755 + $0x8] sm:$0xff]
      %v1758 = vld [vmem:[%s1755 + $0x10] sm:$0xff]
      %v1759 = vld [vmem:[%s1755 + $0x18] sm:$0xff]
      %v1760 = vld [vmem:[%s1755 + $0x20] sm:$0xff]
      %v1762 = vsel %vm1645, %v1754, 0
      %1764 = vmatpush.msra.mxu0 0.0
      %1765 = vmatpush.msra.mxu0 0.0
      %1766 = vmatpush.msra.mxu0 0.0
      %1767 = vmatpush.msra.mxu0 0.0
      %1768 = vmatpush.msra.mxu0 0.0
      %1769 = vmatpush.msra.mxu0 0.0
      %1770 = vmatpush.msra.mxu0 0.0
      %1771 = vmatpush.msra.mxu0 0.0
      %1772 = vmatpush.msra.mxu0 0.0
      %1773 = vmatpush.msra.mxu0 0.0
      %1774 = vmatpush.msra.mxu0 0.0
      %1775 = vmatpush.msra.mxu0 %v1760
      %1776 = vmatpush.msra.mxu0 %v1759
      %1777 = vmatpush.msra.mxu0 %v1758
      %1778 = vmatpush.msra.mxu0 %v1757
      %1779 = vmatpush.msra.mxu0 %v1756
      %1780 = vmatmul.f32.gmra.mxu0 %v1762
      %v1781 = vpop.f32.mrf.mxu0
      %v1782 = vadd.f32 0.0, %v1781
      %1783 = vdwg.mxu0
      %v1784 = vadd.f32 %v1753, %v1782
      %v1785 = vld [vmem:[%s10] sm:$0x1]
      %v1786 = vadd.f32 %v1784, %v1785
      %v1787 = vmax.f32 %v1786, 0.0
      %vm1788 = vcmask 516096
      %1789 = vst.msk [vmem:[%s382] sm:$0x1] %vm1788, %v1787
      %p1790 = scmp.lt.s32.totalorder %s22, 9
      %s1791 = scalar_select %p1790, %s22, 9
      %s1792 = scalar_lea.vmem %s11, %s1791
      // Predicated region
      $region65: #{matching_lenet_forward.2} parent=63 // pred_check
        %p1793 = pneg %p276
      $region66: #{matching_lenet_forward.2} parent=63 // pred_check_branch
        %1795 = sbr.rel (%p1793) target = $region68
      $region67: #{matching_lenet_forward.2} parent=63 // pred_region
        _
      $region68: #{matching_lenet_forward.2} parent=63 // pred_fallthru
        _
    $region64: #{matching_lenet_forward.2} parent=5 // pred_fallthru
      _
    %p1796 = scmp.le.s32.totalorder 2, %s17
    // Predicated region
    $region69: #{matching_lenet_forward.2} parent=5 // pred_check
      %p1797 = pneg %p1796
    $region70: #{matching_lenet_forward.2} parent=5 // pred_check_branch
      %1799 = sbr.rel (%p1797) target = $region72
    $region71: #{matching_lenet_forward.2} parent=5 // pred_region
      %s1800 = ssub.s32 %s17, 2
      // Predicated region
      $region73: #{matching_lenet_forward.2} parent=71 // pred_check
        %p1801 = pneg %p282
      $region74: #{matching_lenet_forward.2} parent=71 // pred_check_branch
        %1803 = sbr.rel (%p1801) target = $region76
      $region75: #{matching_lenet_forward.2} parent=71 // pred_region
        %p1804 = scmp.lt.s32.totalorder %s23, 9
        %s1805 = scalar_select %p1804, %s23, 9
        %s1806 = scalar_lea.vmem %s11, %s1805
      $region76: #{matching_lenet_forward.2} parent=71 // pred_fallthru
        _
    $region72: #{matching_lenet_forward.2} parent=5 // pred_fallthru
      _
  $region6: #{matching_lenet_forward.2} parent=0 // loop_footer
    %s21 = sadd.s32 1, %s17
  $region7: #{matching_lenet_forward.2} parent=0 // loop_footer_branch
    %16 = sbr.rel target = $region3
  $region8: #{matching_lenet_forward.2} parent=0 // loop_exit
    _

</llo_original>
